<compile_context>
chip_gen: v7x
topology: tpu7x:2x2x1
jax: 0.10.0
libtpu: 0.0.40
codegen_flags: <defaults>
</compile_context>

<pallas_src>
import jax
import jax.numpy as jnp
from jax.experimental import pallas as pl
from jax.experimental.pallas import tpu as pltpu

INPUT_DIM = 256
HIDDEN_DIMS = [128, 64]
NUM_RISK_LEVELS = 4
LN_EPS = 1e-5

# Packed 16-lane output / fused-head layout (lane index):
#   0: anomaly_logit    1: anomaly_prob (sigmoid of duplicated logit)
#   2-5: risk_logits    6-9: risk_probs (softmax of duplicated logits)
#   10: severity_score (sigmoid)        11-15: zeros
OUT_WIDTH = 16
ANOM_LOGIT_COL = 0
ANOM_PROB_COL = 1
RISK_LOGIT_COL0 = 2
RISK_PROB_COL0 = 6
SEV_COL = 10

DEFAULT_TILE_B = 4096  # fits the 32 MiB scoped-VMEM limit set below on every generation


def _round_up(x, m):
    return ((x + m - 1) // m) * m


def _layernorm(h, gamma, beta):
    # Two-pass PyTorch nn.LayerNorm semantics (biased variance, eps inside rsqrt).
    mean = jnp.mean(h, axis=-1, keepdims=True)
    c = h - mean
    var = jnp.mean(c * c, axis=-1, keepdims=True)
    return c * jax.lax.rsqrt(var + LN_EPS) * gamma + beta


def multitask_head_kernel(
    x_ref,
    w1_ref, b1_ref, g1_ref, be1_ref,
    w2_ref, b2_ref, g2_ref, be2_ref,
    wh_ref, bh_ref,
    out_ref,
):
    x = x_ref[...]  # (TILE_B, 256), bf16 stream (f32 accumulation below)

    # Shared layer 1: Linear -> ReLU -> (Dropout=identity) -> LayerNorm
    h = jnp.dot(x, w1_ref[...], preferred_element_type=jnp.float32) + b1_ref[...]
    h = jnp.maximum(h, 0.0)
    h = _layernorm(h, g1_ref[...], be1_ref[...])

    # Shared layer 2
    h = jnp.dot(h.astype(w2_ref.dtype), w2_ref[...],
                preferred_element_type=jnp.float32) + b2_ref[...]
    h = jnp.maximum(h, 0.0)
    h = _layernorm(h, g2_ref[...], be2_ref[...])

    # Fused heads: one (64 -> 16) matmul emitting logits directly in the packed layout
    # (anomaly / risk / severity columns duplicated where a prob is also needed).
    heads = jnp.dot(h.astype(wh_ref.dtype), wh_ref[...],
                    preferred_element_type=jnp.float32) + bh_ref[...]

    col = jax.lax.broadcasted_iota(jnp.int32, heads.shape, 1)
    risk_mask = (col >= RISK_PROB_COL0) & (col < RISK_PROB_COL0 + NUM_RISK_LEVELS)
    sig_mask = (col == ANOM_PROB_COL) | (col == SEV_COL)

    # Lane-masked softmax over the duplicated risk columns (6..9); other lanes -> exp(-inf)=0.
    masked = jnp.where(risk_mask, heads, -jnp.inf)
    rmax = jnp.max(masked, axis=-1, keepdims=True)
    e = jnp.exp(masked - rmax)
    rsum = jnp.sum(e, axis=-1, keepdims=True)
    rprob = e / rsum  # exact divide

    out_ref[...] = jnp.where(risk_mask, rprob,
                             jnp.where(sig_mask, jax.nn.sigmoid(heads), heads))


def _const_spec(arr, single_buffer):
    # Parameters: constant index_map -> VMEM-resident across the whole grid.
    if single_buffer:
        # Single-buffer the constant blocks to free VMEM headroom for larger batch tiles.
        return pl.BlockSpec(arr.shape, lambda i: (0, 0), pipeline_mode=pl.Buffered(1))
    return pl.BlockSpec(arr.shape, lambda i: (0, 0))


def multitask_head_forward(features, params, tile_b=DEFAULT_TILE_B):
    """features: [B, INPUT_DIM]. params: dict from init_params()."""
    B, D = features.shape
    assert D == INPUT_DIM

    # bf16 feature stream: halves the dominant HBM input traffic (f32 acc in the kernel).
    x = features.astype(params["w1"].dtype)

    padded_b = max(8, _round_up(B, 8))
    tb = min(_round_up(max(tile_b, 8), 8), padded_b)
    # v7x megacore: dimension_semantics=("parallel",) only engages both TensorCores if the
    # grid has >= 2 steps; split large single-tile batches in two.
    if padded_b >= 1024 and pl.cdiv(padded_b, tb) < 2:
        tb = _round_up(pl.cdiv(padded_b, 2), 8)
    grid = (pl.cdiv(B, tb),)

    args = (
        x,
        params["w1"], params["b1"], params["g1"], params["be1"],
        params["w2"], params["b2"], params["g2"], params["be2"],
        params["w_heads"], params["b_heads"],
    )

    h1, h2 = HIDDEN_DIMS
    weight_bytes = sum(int(a.size) * a.dtype.itemsize for a in args[1:])
    cost = pl.CostEstimate(
        flops=2 * B * (INPUT_DIM * h1 + h1 * h2 + h2 * OUT_WIDTH),
        transcendentals=8 * B,  # 4 exp (softmax) + 2 sigmoid + 2 rsqrt per row
        bytes_accessed=B * (x.dtype.itemsize * INPUT_DIM + 4 * OUT_WIDTH) + weight_bytes,
    )

    def call(single_buffer_params):
        x_spec = pl.BlockSpec((tb, INPUT_DIM), lambda i: (i, 0))
        out_spec = pl.BlockSpec((tb, OUT_WIDTH), lambda i: (i, 0))
        in_specs = [x_spec] + [_const_spec(a, single_buffer_params) for a in args[1:]]
        return pl.pallas_call(
            multitask_head_kernel,
            out_shape=jax.ShapeDtypeStruct((B, OUT_WIDTH), jnp.float32),
            grid=grid,
            in_specs=in_specs,
            out_specs=out_spec,
            compiler_params=pltpu.CompilerParams(
                dimension_semantics=("parallel",),
                vmem_limit_bytes=32 * 1024 * 1024,  # headroom for TILE_B=4096 on v5e
            ),
            cost_estimate=cost,
        )(*args)

    try:
        out = call(single_buffer_params=True)
    except Exception:
        # TODO(synk): pipeline_mode=pl.Buffered(1) unsupported in this jax build; fall back
        # to default double-buffered parameter blocks (~200 KiB extra VMEM, same math).
        out = call(single_buffer_params=False)

    return {
        "anomaly_logits": out[:, ANOM_LOGIT_COL],                                  # .squeeze(-1)
        "anomaly_probs": out[:, ANOM_PROB_COL],
        "risk_logits": out[:, RISK_LOGIT_COL0:RISK_LOGIT_COL0 + NUM_RISK_LEVELS],
        "risk_probs": out[:, RISK_PROB_COL0:RISK_PROB_COL0 + NUM_RISK_LEVELS],
        "severity_scores": out[:, SEV_COL],
    }


def init_params(key, param_dtype=jnp.bfloat16):
    """Deterministic synthetic parameters matching the nn.Module shapes.

    Linear weights stored as [in, out] (transposed vs PyTorch's [out, in]); biases / LN
    params stored as [1, dim] for lane-aligned broadcast.  The three head projections are
    packed into a fused w_heads [64, 16] / b_heads [1, 16] in the duplicated-column layout
    the kernel writes out directly.  w1/w2/w_heads are stored in `param_dtype` (bf16) for
    the MXU; f32 masters are kept for the pure-JAX reference.
    """
    keys = jax.random.split(key, 5)
    h1, h2 = HIDDEN_DIMS

    def lin(k, fan_in, fan_out):
        kw, kb = jax.random.split(k)
        bound = 1.0 / jnp.sqrt(fan_in)
        w = jax.random.uniform(kw, (fan_in, fan_out), jnp.float32, -bound, bound)
        b = jax.random.uniform(kb, (1, fan_out), jnp.float32, -bound, bound)
        return w, b

    w1, b1 = lin(keys[0], INPUT_DIM, h1)
    w2, b2 = lin(keys[1], h1, h2)
    wa, ba = lin(keys[2], h2, 1)
    wr, br = lin(keys[3], h2, NUM_RISK_LEVELS)
    ws, bs = lin(keys[4], h2, 1)

    pad = OUT_WIDTH - (SEV_COL + 1)  # 5 zero columns
    # [anom, anom(dup), risk x4, risk x4 (dup), severity, 0 x5]
    w_heads = jnp.concatenate([wa, wa, wr, wr, ws, jnp.zeros((h2, pad), jnp.float32)], axis=1)
    b_heads = jnp.concatenate([ba, ba, br, br, bs, jnp.zeros((1, pad), jnp.float32)], axis=1)

    return {
        # Kernel parameters.
        "w1": w1.astype(param_dtype), "b1": b1,
        "g1": jnp.ones((1, h1), jnp.float32), "be1": jnp.zeros((1, h1), jnp.float32),
        "w2": w2.astype(param_dtype), "b2": b2,
        "g2": jnp.ones((1, h2), jnp.float32), "be2": jnp.zeros((1, h2), jnp.float32),
        "w_heads": w_heads.astype(param_dtype), "b_heads": b_heads,
        # f32 masters for the reference.
        "w1_f32": w1, "w2_f32": w2,
        "wa": wa, "ba": ba, "wr": wr, "br": br, "ws": ws, "bs": bs,
    }


def _reference_forward(features, p):
    """Pure-JAX f32 reference mirroring the PyTorch module (eval mode)."""
    def ln(h, g, b):
        m = jnp.mean(h, axis=-1, keepdims=True)
        v = jnp.mean((h - m) ** 2, axis=-1, keepdims=True)
        return (h - m) / jnp.sqrt(v + LN_EPS) * g + b

    h = ln(jnp.maximum(features @ p["w1_f32"] + p["b1"], 0.0), p["g1"], p["be1"])
    h = ln(jnp.maximum(h @ p["w2_f32"] + p["b2"], 0.0), p["g2"], p["be2"])
    al = (h @ p["wa"] + p["ba"])[:, 0]
    rl = h @ p["wr"] + p["br"]
    sv = jax.nn.sigmoid((h @ p["ws"] + p["bs"])[:, 0])
    return {
        "anomaly_logits": al,
        "anomaly_probs": jax.nn.sigmoid(al),
        "risk_logits": rl,
        "risk_probs": jax.nn.softmax(rl, axis=1),
        "severity_scores": sv,
    }


def _check(out, ref, atol=3e-2, rtol=3e-2):
    # bf16 matmul inputs (f32 accumulation) -> bf16-level tolerance vs the f32 reference.
    for name in ref:
        a = jnp.asarray(out[name], jnp.float32)
        b = jnp.asarray(ref[name], jnp.float32)
        err = float(jnp.max(jnp.abs(a - b)))
        assert jnp.allclose(a, b, atol=atol, rtol=rtol), f"{name}: max abs err {err}"


if __name__ == "__main__":
    key = jax.random.PRNGKey(0)
    k_feat, k_feat2, k_par = jax.random.split(key, 3)
    params = init_params(k_par)

    # Small shape consistent with the module: [batch=2, input_dim=256].
    features = jax.random.normal(k_feat, (2, INPUT_DIM), jnp.float32)
    out = multitask_head_forward(features, params)
    out = jax.tree_util.tree_map(jax.block_until_ready, out)
    _check(out, _reference_forward(features, params))

    # Exercise the batch grid (multiple tiles + ragged tail block).
    features2 = jax.random.normal(k_feat2, (19, INPUT_DIM), jnp.float32)
    out2 = multitask_head_forward(features2, params, tile_b=8)
    out2 = jax.tree_util.tree_map(jax.block_until_ready, out2)
    _check(out2, _reference_forward(features2, params))

    print("KERNEL_OK")
</pallas_src>

<mosaic_0001>
module attributes {stable_mosaic.version = 11 : i64} {
  func.func @multitask_head_kernel(%arg0: i32, %arg1: memref<8x256xbf16, #tpu.memory_space<vmem>>, %arg2: memref<256x128xbf16, #tpu.memory_space<vmem>>, %arg3: memref<1x128xf32, #tpu.memory_space<vmem>>, %arg4: memref<1x128xf32, #tpu.memory_space<vmem>>, %arg5: memref<1x128xf32, #tpu.memory_space<vmem>>, %arg6: memref<128x64xbf16, #tpu.memory_space<vmem>>, %arg7: memref<1x64xf32, #tpu.memory_space<vmem>>, %arg8: memref<1x64xf32, #tpu.memory_space<vmem>>, %arg9: memref<1x64xf32, #tpu.memory_space<vmem>>, %arg10: memref<64x16xbf16, #tpu.memory_space<vmem>>, %arg11: memref<1x16xf32, #tpu.memory_space<vmem>>, %arg12: memref<8x16xf32, #tpu.memory_space<vmem>>) attributes {dimension_semantics = [#tpu.dimension_semantics<parallel>], iteration_bounds = array<i64: 1>, scalar_prefetch = 0 : i64, scratch_operands = 0 : i64, tpu.core_type = #tpu.core_type<tc>, window_params = [{transform_indices = @transform_0, window_bounds = array<i64: 8, 256>}, {pipeline_mode = #tpu.pipeline_mode<synchronous>, transform_indices = @transform_1, window_bounds = array<i64: 256, 128>}, {pipeline_mode = #tpu.pipeline_mode<synchronous>, transform_indices = @transform_2, window_bounds = array<i64: 1, 128>}, {pipeline_mode = #tpu.pipeline_mode<synchronous>, transform_indices = @transform_3, window_bounds = array<i64: 1, 128>}, {pipeline_mode = #tpu.pipeline_mode<synchronous>, transform_indices = @transform_4, window_bounds = array<i64: 1, 128>}, {pipeline_mode = #tpu.pipeline_mode<synchronous>, transform_indices = @transform_5, window_bounds = array<i64: 128, 64>}, {pipeline_mode = #tpu.pipeline_mode<synchronous>, transform_indices = @transform_6, window_bounds = array<i64: 1, 64>}, {pipeline_mode = #tpu.pipeline_mode<synchronous>, transform_indices = @transform_7, window_bounds = array<i64: 1, 64>}, {pipeline_mode = #tpu.pipeline_mode<synchronous>, transform_indices = @transform_8, window_bounds = array<i64: 1, 64>}, {pipeline_mode = #tpu.pipeline_mode<synchronous>, transform_indices = @transform_9, window_bounds = array<i64: 64, 16>}, {pipeline_mode = #tpu.pipeline_mode<synchronous>, transform_indices = @transform_10, window_bounds = array<i64: 1, 16>}, {transform_indices = @transform_11, window_bounds = array<i64: 8, 16>}]} {
    %c0 = arith.constant 0 : index
    %c0_0 = arith.constant 0 : index
    %0 = vector.load %arg1[%c0, %c0_0] : memref<8x256xbf16, #tpu.memory_space<vmem>>, vector<8x256xbf16>
    %c0_1 = arith.constant 0 : index
    %c0_2 = arith.constant 0 : index
    %1 = vector.load %arg2[%c0_1, %c0_2] : memref<256x128xbf16, #tpu.memory_space<vmem>>, vector<256x128xbf16>
    %cst = arith.constant dense<0.000000e+00> : vector<8x128xf32>
    %2 = tpu.matmul %0, %1, %cst {dimension_numbers = #tpu.dot_dimension_numbers<[1], [0], [0], [1], [0, 0, 1, 1], [], []>} : vector<8x256xbf16>, vector<256x128xbf16>, vector<8x128xf32> -> vector<8x128xf32>
    %c0_3 = arith.constant 0 : index
    %c0_4 = arith.constant 0 : index
    %3 = vector.load %arg3[%c0_3, %c0_4] : memref<1x128xf32, #tpu.memory_space<vmem>>, vector<1x128xf32>
    %4 = vector.broadcast %3 : vector<1x128xf32> to vector<8x128xf32>
    %5 = arith.addf %2, %4 : vector<8x128xf32>
    %cst_5 = arith.constant 0.000000e+00 : f32
    %6 = vector.broadcast %cst_5 : f32 to vector<8x128xf32>
    %7 = arith.maximumf %5, %6 : vector<8x128xf32>
    %c0_6 = arith.constant 0 : index
    %c0_7 = arith.constant 0 : index
    %8 = vector.load %arg4[%c0_6, %c0_7] : memref<1x128xf32, #tpu.memory_space<vmem>>, vector<1x128xf32>
    %c0_8 = arith.constant 0 : index
    %c0_9 = arith.constant 0 : index
    %9 = vector.load %arg5[%c0_8, %c0_9] : memref<1x128xf32, #tpu.memory_space<vmem>>, vector<1x128xf32>
    %cst_10 = arith.constant dense<0.000000e+00> : vector<8xf32>
    %10 = vector.multi_reduction <add>, %7, %cst_10 [1] : vector<8x128xf32> to vector<8xf32>
    %11 = vector.shape_cast %10 : vector<8xf32> to vector<8x1xf32>
    %cst_11 = arith.constant 1.280000e+02 : f32
    %12 = vector.broadcast %cst_11 : f32 to vector<8x1xf32>
    %13 = arith.divf %11, %12 : vector<8x1xf32>
    %14 = vector.broadcast %13 : vector<8x1xf32> to vector<8x128xf32>
    %15 = arith.subf %7, %14 : vector<8x128xf32>
    %16 = arith.mulf %15, %15 : vector<8x128xf32>
    %cst_12 = arith.constant dense<0.000000e+00> : vector<8xf32>
    %17 = vector.multi_reduction <add>, %16, %cst_12 [1] : vector<8x128xf32> to vector<8xf32>
    %18 = vector.shape_cast %17 : vector<8xf32> to vector<8x1xf32>
    %cst_13 = arith.constant 1.280000e+02 : f32
    %19 = vector.broadcast %cst_13 : f32 to vector<8x1xf32>
    %20 = arith.divf %18, %19 : vector<8x1xf32>
    %cst_14 = arith.constant 9.99999974E-6 : f32
    %21 = vector.broadcast %cst_14 : f32 to vector<8x1xf32>
    %22 = arith.addf %20, %21 : vector<8x1xf32>
    %23 = math.rsqrt %22 : vector<8x1xf32>
    %24 = vector.broadcast %23 : vector<8x1xf32> to vector<8x128xf32>
    %25 = arith.mulf %15, %24 : vector<8x128xf32>
    %26 = vector.broadcast %8 : vector<1x128xf32> to vector<8x128xf32>
    %27 = arith.mulf %25, %26 : vector<8x128xf32>
    %28 = vector.broadcast %9 : vector<1x128xf32> to vector<8x128xf32>
    %29 = arith.addf %27, %28 : vector<8x128xf32>
    %30 = arith.truncf %29 : vector<8x128xf32> to vector<8x128xbf16>
    %c0_15 = arith.constant 0 : index
    %c0_16 = arith.constant 0 : index
    %31 = vector.load %arg6[%c0_15, %c0_16] : memref<128x64xbf16, #tpu.memory_space<vmem>>, vector<128x64xbf16>
    %cst_17 = arith.constant dense<0.000000e+00> : vector<8x64xf32>
    %32 = tpu.matmul %30, %31, %cst_17 {dimension_numbers = #tpu.dot_dimension_numbers<[1], [0], [0], [1], [0, 0, 1, 1], [], []>} : vector<8x128xbf16>, vector<128x64xbf16>, vector<8x64xf32> -> vector<8x64xf32>
    %c0_18 = arith.constant 0 : index
    %c0_19 = arith.constant 0 : index
    %33 = vector.load %arg7[%c0_18, %c0_19] : memref<1x64xf32, #tpu.memory_space<vmem>>, vector<1x64xf32>
    %34 = vector.broadcast %33 : vector<1x64xf32> to vector<8x64xf32>
    %35 = arith.addf %32, %34 : vector<8x64xf32>
    %cst_20 = arith.constant 0.000000e+00 : f32
    %36 = vector.broadcast %cst_20 : f32 to vector<8x64xf32>
    %37 = arith.maximumf %35, %36 : vector<8x64xf32>
    %c0_21 = arith.constant 0 : index
    %c0_22 = arith.constant 0 : index
    %38 = vector.load %arg8[%c0_21, %c0_22] : memref<1x64xf32, #tpu.memory_space<vmem>>, vector<1x64xf32>
    %c0_23 = arith.constant 0 : index
    %c0_24 = arith.constant 0 : index
    %39 = vector.load %arg9[%c0_23, %c0_24] : memref<1x64xf32, #tpu.memory_space<vmem>>, vector<1x64xf32>
    %cst_25 = arith.constant dense<0.000000e+00> : vector<8xf32>
    %40 = vector.multi_reduction <add>, %37, %cst_25 [1] : vector<8x64xf32> to vector<8xf32>
    %41 = vector.shape_cast %40 : vector<8xf32> to vector<8x1xf32>
    %cst_26 = arith.constant 6.400000e+01 : f32
    %42 = vector.broadcast %cst_26 : f32 to vector<8x1xf32>
    %43 = arith.divf %41, %42 : vector<8x1xf32>
    %44 = vector.broadcast %43 : vector<8x1xf32> to vector<8x64xf32>
    %45 = arith.subf %37, %44 : vector<8x64xf32>
    %46 = arith.mulf %45, %45 : vector<8x64xf32>
    %cst_27 = arith.constant dense<0.000000e+00> : vector<8xf32>
    %47 = vector.multi_reduction <add>, %46, %cst_27 [1] : vector<8x64xf32> to vector<8xf32>
    %48 = vector.shape_cast %47 : vector<8xf32> to vector<8x1xf32>
    %cst_28 = arith.constant 6.400000e+01 : f32
    %49 = vector.broadcast %cst_28 : f32 to vector<8x1xf32>
    %50 = arith.divf %48, %49 : vector<8x1xf32>
    %cst_29 = arith.constant 9.99999974E-6 : f32
    %51 = vector.broadcast %cst_29 : f32 to vector<8x1xf32>
    %52 = arith.addf %50, %51 : vector<8x1xf32>
    %53 = math.rsqrt %52 : vector<8x1xf32>
    %54 = vector.broadcast %53 : vector<8x1xf32> to vector<8x64xf32>
    %55 = arith.mulf %45, %54 : vector<8x64xf32>
    %56 = vector.broadcast %38 : vector<1x64xf32> to vector<8x64xf32>
    %57 = arith.mulf %55, %56 : vector<8x64xf32>
    %58 = vector.broadcast %39 : vector<1x64xf32> to vector<8x64xf32>
    %59 = arith.addf %57, %58 : vector<8x64xf32>
    %60 = arith.truncf %59 : vector<8x64xf32> to vector<8x64xbf16>
    %c0_30 = arith.constant 0 : index
    %c0_31 = arith.constant 0 : index
    %61 = vector.load %arg10[%c0_30, %c0_31] : memref<64x16xbf16, #tpu.memory_space<vmem>>, vector<64x16xbf16>
    %cst_32 = arith.constant dense<0.000000e+00> : vector<8x16xf32>
    %62 = tpu.matmul %60, %61, %cst_32 {dimension_numbers = #tpu.dot_dimension_numbers<[1], [0], [0], [1], [0, 0, 1, 1], [], []>} : vector<8x64xbf16>, vector<64x16xbf16>, vector<8x16xf32> -> vector<8x16xf32>
    %c0_33 = arith.constant 0 : index
    %c0_34 = arith.constant 0 : index
    %63 = vector.load %arg11[%c0_33, %c0_34] : memref<1x16xf32, #tpu.memory_space<vmem>>, vector<1x16xf32>
    %64 = vector.broadcast %63 : vector<1x16xf32> to vector<8x16xf32>
    %65 = arith.addf %62, %64 : vector<8x16xf32>
    %66 = tpu.iota {dimensions = array<i32: 1>} : vector<8x16xi32>
    %c6_i32 = arith.constant 6 : i32
    %67 = vector.broadcast %c6_i32 : i32 to vector<8x16xi32>
    %68 = arith.cmpi sge, %66, %67 : vector<8x16xi32>
    %c10_i32 = arith.constant 10 : i32
    %69 = vector.broadcast %c10_i32 : i32 to vector<8x16xi32>
    %70 = arith.cmpi slt, %66, %69 : vector<8x16xi32>
    %71 = arith.andi %68, %70 : vector<8x16xi1>
    %c1_i32 = arith.constant 1 : i32
    %72 = vector.broadcast %c1_i32 : i32 to vector<8x16xi32>
    %73 = arith.cmpi eq, %66, %72 : vector<8x16xi32>
    %c10_i32_35 = arith.constant 10 : i32
    %74 = vector.broadcast %c10_i32_35 : i32 to vector<8x16xi32>
    %75 = arith.cmpi eq, %66, %74 : vector<8x16xi32>
    %76 = arith.ori %73, %75 : vector<8x16xi1>
    %cst_36 = arith.constant 0xFF800000 : f32
    %77 = vector.broadcast %cst_36 : f32 to vector<8x16xf32>
    %78 = arith.select %71, %65, %77 : vector<8x16xi1>, vector<8x16xf32>
    %cst_37 = arith.constant dense<0xFF800000> : vector<8xf32>
    %79 = vector.multi_reduction <maximumf>, %78, %cst_37 [1] : vector<8x16xf32> to vector<8xf32>
    %80 = vector.shape_cast %79 : vector<8xf32> to vector<8x1xf32>
    %81 = vector.broadcast %80 : vector<8x1xf32> to vector<8x16xf32>
    %82 = arith.subf %78, %81 : vector<8x16xf32>
    %83 = math.exp %82 : vector<8x16xf32>
    %cst_38 = arith.constant dense<0.000000e+00> : vector<8xf32>
    %84 = vector.multi_reduction <add>, %83, %cst_38 [1] : vector<8x16xf32> to vector<8xf32>
    %85 = vector.shape_cast %84 : vector<8xf32> to vector<8x1xf32>
    %86 = vector.broadcast %85 : vector<8x1xf32> to vector<8x16xf32>
    %87 = arith.divf %83, %86 : vector<8x16xf32>
    %88 = arith.negf %65 : vector<8x16xf32>
    %89 = math.exp %88 : vector<8x16xf32>
    %cst_39 = arith.constant 1.000000e+00 : f32
    %90 = vector.broadcast %cst_39 : f32 to vector<8x16xf32>
    %91 = arith.addf %90, %89 : vector<8x16xf32>
    %92 = arith.divf %90, %91 : vector<8x16xf32>
    %93 = arith.select %76, %92, %65 : vector<8x16xi1>, vector<8x16xf32>
    %94 = arith.select %71, %87, %93 : vector<8x16xi1>, vector<8x16xf32>
    %c0_40 = arith.constant 0 : index
    %c0_41 = arith.constant 0 : index
    %95 = vector.load %arg12[%c0_40, %c0_41] : memref<8x16xf32, #tpu.memory_space<vmem>>, vector<8x16xf32>
    tpu.vector_store %arg12[%c0_40, %c0_41], %94 {strides = array<i32>} : memref<8x16xf32, #tpu.memory_space<vmem>>, vector<8x16xf32>,
    return
  }
  func.func @transform_0(%arg0: i32) -> (i32, i32) {
    %c0_i32 = arith.constant 0 : i32
    %c0_i32_0 = arith.constant 0 : i32
    return %arg0, %c0_i32 : i32, i32
  }
  func.func @transform_1(%arg0: i32) -> (i32, i32) {
    %c0_i32 = arith.constant 0 : i32
    %c0_i32_0 = arith.constant 0 : i32
    %c0_i32_1 = arith.constant 0 : i32
    return %c0_i32, %c0_i32_0 : i32, i32
  }
  func.func @transform_2(%arg0: i32) -> (i32, i32) {
    %c0_i32 = arith.constant 0 : i32
    %c0_i32_0 = arith.constant 0 : i32
    %c0_i32_1 = arith.constant 0 : i32
    return %c0_i32, %c0_i32_0 : i32, i32
  }
  func.func @transform_3(%arg0: i32) -> (i32, i32) {
    %c0_i32 = arith.constant 0 : i32
    %c0_i32_0 = arith.constant 0 : i32
    %c0_i32_1 = arith.constant 0 : i32
    return %c0_i32, %c0_i32_0 : i32, i32
  }
  func.func @transform_4(%arg0: i32) -> (i32, i32) {
    %c0_i32 = arith.constant 0 : i32
    %c0_i32_0 = arith.constant 0 : i32
    %c0_i32_1 = arith.constant 0 : i32
    return %c0_i32, %c0_i32_0 : i32, i32
  }
  func.func @transform_5(%arg0: i32) -> (i32, i32) {
    %c0_i32 = arith.constant 0 : i32
    %c0_i32_0 = arith.constant 0 : i32
    %c0_i32_1 = arith.constant 0 : i32
    return %c0_i32, %c0_i32_0 : i32, i32
  }
  func.func @transform_6(%arg0: i32) -> (i32, i32) {
    %c0_i32 = arith.constant 0 : i32
    %c0_i32_0 = arith.constant 0 : i32
    %c0_i32_1 = arith.constant 0 : i32
    return %c0_i32, %c0_i32_0 : i32, i32
  }
  func.func @transform_7(%arg0: i32) -> (i32, i32) {
    %c0_i32 = arith.constant 0 : i32
    %c0_i32_0 = arith.constant 0 : i32
    %c0_i32_1 = arith.constant 0 : i32
    return %c0_i32, %c0_i32_0 : i32, i32
  }
  func.func @transform_8(%arg0: i32) -> (i32, i32) {
    %c0_i32 = arith.constant 0 : i32
    %c0_i32_0 = arith.constant 0 : i32
    %c0_i32_1 = arith.constant 0 : i32
    return %c0_i32, %c0_i32_0 : i32, i32
  }
  func.func @transform_9(%arg0: i32) -> (i32, i32) {
    %c0_i32 = arith.constant 0 : i32
    %c0_i32_0 = arith.constant 0 : i32
    %c0_i32_1 = arith.constant 0 : i32
    return %c0_i32, %c0_i32_0 : i32, i32
  }
  func.func @transform_10(%arg0: i32) -> (i32, i32) {
    %c0_i32 = arith.constant 0 : i32
    %c0_i32_0 = arith.constant 0 : i32
    %c0_i32_1 = arith.constant 0 : i32
    return %c0_i32, %c0_i32_0 : i32, i32
  }
  func.func @transform_11(%arg0: i32) -> (i32, i32) {
    %c0_i32 = arith.constant 0 : i32
    %c0_i32_0 = arith.constant 0 : i32
    return %arg0, %c0_i32 : i32, i32
  }
}

module attributes {stable_mosaic.version = 11 : i64} {
  func.func @multitask_head_kernel(%arg0: i32, %arg1: memref<8x256xbf16, #tpu.memory_space<vmem>>, %arg2: memref<256x128xbf16, #tpu.memory_space<vmem>>, %arg3: memref<1x128xf32, #tpu.memory_space<vmem>>, %arg4: memref<1x128xf32, #tpu.memory_space<vmem>>, %arg5: memref<1x128xf32, #tpu.memory_space<vmem>>, %arg6: memref<128x64xbf16, #tpu.memory_space<vmem>>, %arg7: memref<1x64xf32, #tpu.memory_space<vmem>>, %arg8: memref<1x64xf32, #tpu.memory_space<vmem>>, %arg9: memref<1x64xf32, #tpu.memory_space<vmem>>, %arg10: memref<64x16xbf16, #tpu.memory_space<vmem>>, %arg11: memref<1x16xf32, #tpu.memory_space<vmem>>, %arg12: memref<8x16xf32, #tpu.memory_space<vmem>>) attributes {dimension_semantics = [#tpu.dimension_semantics<parallel>], iteration_bounds = array<i64: 1>, scalar_prefetch = 0 : i64, scratch_operands = 0 : i64, tpu.core_type = #tpu.core_type<tc>, window_params = [{transform_indices = @transform_0, window_bounds = array<i64: 8, 256>}, {pipeline_mode = #tpu.pipeline_mode<synchronous>, transform_indices = @transform_1, window_bounds = array<i64: 256, 128>}, {pipeline_mode = #tpu.pipeline_mode<synchronous>, transform_indices = @transform_2, window_bounds = array<i64: 1, 128>}, {pipeline_mode = #tpu.pipeline_mode<synchronous>, transform_indices = @transform_3, window_bounds = array<i64: 1, 128>}, {pipeline_mode = #tpu.pipeline_mode<synchronous>, transform_indices = @transform_4, window_bounds = array<i64: 1, 128>}, {pipeline_mode = #tpu.pipeline_mode<synchronous>, transform_indices = @transform_5, window_bounds = array<i64: 128, 64>}, {pipeline_mode = #tpu.pipeline_mode<synchronous>, transform_indices = @transform_6, window_bounds = array<i64: 1, 64>}, {pipeline_mode = #tpu.pipeline_mode<synchronous>, transform_indices = @transform_7, window_bounds = array<i64: 1, 64>}, {pipeline_mode = #tpu.pipeline_mode<synchronous>, transform_indices = @transform_8, window_bounds = array<i64: 1, 64>}, {pipeline_mode = #tpu.pipeline_mode<synchronous>, transform_indices = @transform_9, window_bounds = array<i64: 64, 16>}, {pipeline_mode = #tpu.pipeline_mode<synchronous>, transform_indices = @transform_10, window_bounds = array<i64: 1, 16>}, {transform_indices = @transform_11, window_bounds = array<i64: 8, 16>}]} {
    %c0 = arith.constant 0 : index
    %c0_0 = arith.constant 0 : index
    %0 = vector.load %arg1[%c0, %c0_0] : memref<8x256xbf16, #tpu.memory_space<vmem>>, vector<8x256xbf16>
    %c0_1 = arith.constant 0 : index
    %c0_2 = arith.constant 0 : index
    %1 = vector.load %arg2[%c0_1, %c0_2] : memref<256x128xbf16, #tpu.memory_space<vmem>>, vector<256x128xbf16>
    %cst = arith.constant dense<0.000000e+00> : vector<8x128xf32>
    %2 = tpu.matmul %0, %1, %cst {dimension_numbers = #tpu.dot_dimension_numbers<[1], [0], [0], [1], [0, 0, 1, 1], [], []>} : vector<8x256xbf16>, vector<256x128xbf16>, vector<8x128xf32> -> vector<8x128xf32>
    %c0_3 = arith.constant 0 : index
    %c0_4 = arith.constant 0 : index
    %3 = vector.load %arg3[%c0_3, %c0_4] : memref<1x128xf32, #tpu.memory_space<vmem>>, vector<1x128xf32>
    %4 = vector.broadcast %3 : vector<1x128xf32> to vector<8x128xf32>
    %5 = arith.addf %2, %4 : vector<8x128xf32>
    %cst_5 = arith.constant 0.000000e+00 : f32
    %6 = vector.broadcast %cst_5 : f32 to vector<8x128xf32>
    %7 = arith.maximumf %5, %6 : vector<8x128xf32>
    %c0_6 = arith.constant 0 : index
    %c0_7 = arith.constant 0 : index
    %8 = vector.load %arg4[%c0_6, %c0_7] : memref<1x128xf32, #tpu.memory_space<vmem>>, vector<1x128xf32>
    %c0_8 = arith.constant 0 : index
    %c0_9 = arith.constant 0 : index
    %9 = vector.load %arg5[%c0_8, %c0_9] : memref<1x128xf32, #tpu.memory_space<vmem>>, vector<1x128xf32>
    %cst_10 = arith.constant dense<0.000000e+00> : vector<8xf32>
    %10 = vector.multi_reduction <add>, %7, %cst_10 [1] : vector<8x128xf32> to vector<8xf32>
    %11 = vector.shape_cast %10 : vector<8xf32> to vector<8x1xf32>
    %cst_11 = arith.constant 1.280000e+02 : f32
    %12 = vector.broadcast %cst_11 : f32 to vector<8x1xf32>
    %13 = arith.divf %11, %12 : vector<8x1xf32>
    %14 = vector.broadcast %13 : vector<8x1xf32> to vector<8x128xf32>
    %15 = arith.subf %7, %14 : vector<8x128xf32>
    %16 = arith.mulf %15, %15 : vector<8x128xf32>
    %cst_12 = arith.constant dense<0.000000e+00> : vector<8xf32>
    %17 = vector.multi_reduction <add>, %16, %cst_12 [1] : vector<8x128xf32> to vector<8xf32>
    %18 = vector.shape_cast %17 : vector<8xf32> to vector<8x1xf32>
    %cst_13 = arith.constant 1.280000e+02 : f32
    %19 = vector.broadcast %cst_13 : f32 to vector<8x1xf32>
    %20 = arith.divf %18, %19 : vector<8x1xf32>
    %cst_14 = arith.constant 9.99999974E-6 : f32
    %21 = vector.broadcast %cst_14 : f32 to vector<8x1xf32>
    %22 = arith.addf %20, %21 : vector<8x1xf32>
    %23 = math.rsqrt %22 : vector<8x1xf32>
    %24 = vector.broadcast %23 : vector<8x1xf32> to vector<8x128xf32>
    %25 = arith.mulf %15, %24 : vector<8x128xf32>
    %26 = vector.broadcast %8 : vector<1x128xf32> to vector<8x128xf32>
    %27 = arith.mulf %25, %26 : vector<8x128xf32>
    %28 = vector.broadcast %9 : vector<1x128xf32> to vector<8x128xf32>
    %29 = arith.addf %27, %28 : vector<8x128xf32>
    %30 = arith.truncf %29 : vector<8x128xf32> to vector<8x128xbf16>
    %c0_15 = arith.constant 0 : index
    %c0_16 = arith.constant 0 : index
    %31 = vector.load %arg6[%c0_15, %c0_16] : memref<128x64xbf16, #tpu.memory_space<vmem>>, vector<128x64xbf16>
    %cst_17 = arith.constant dense<0.000000e+00> : vector<8x64xf32>
    %32 = tpu.matmul %30, %31, %cst_17 {dimension_numbers = #tpu.dot_dimension_numbers<[1], [0], [0], [1], [0, 0, 1, 1], [], []>} : vector<8x128xbf16>, vector<128x64xbf16>, vector<8x64xf32> -> vector<8x64xf32>
    %c0_18 = arith.constant 0 : index
    %c0_19 = arith.constant 0 : index
    %33 = vector.load %arg7[%c0_18, %c0_19] : memref<1x64xf32, #tpu.memory_space<vmem>>, vector<1x64xf32>
    %34 = vector.broadcast %33 : vector<1x64xf32> to vector<8x64xf32>
    %35 = arith.addf %32, %34 : vector<8x64xf32>
    %cst_20 = arith.constant 0.000000e+00 : f32
    %36 = vector.broadcast %cst_20 : f32 to vector<8x64xf32>
    %37 = arith.maximumf %35, %36 : vector<8x64xf32>
    %c0_21 = arith.constant 0 : index
    %c0_22 = arith.constant 0 : index
    %38 = vector.load %arg8[%c0_21, %c0_22] : memref<1x64xf32, #tpu.memory_space<vmem>>, vector<1x64xf32>
    %c0_23 = arith.constant 0 : index
    %c0_24 = arith.constant 0 : index
    %39 = vector.load %arg9[%c0_23, %c0_24] : memref<1x64xf32, #tpu.memory_space<vmem>>, vector<1x64xf32>
    %cst_25 = arith.constant dense<0.000000e+00> : vector<8xf32>
    %40 = vector.multi_reduction <add>, %37, %cst_25 [1] : vector<8x64xf32> to vector<8xf32>
    %41 = vector.shape_cast %40 : vector<8xf32> to vector<8x1xf32>
    %cst_26 = arith.constant 6.400000e+01 : f32
    %42 = vector.broadcast %cst_26 : f32 to vector<8x1xf32>
    %43 = arith.divf %41, %42 : vector<8x1xf32>
    %44 = vector.broadcast %43 : vector<8x1xf32> to vector<8x64xf32>
    %45 = arith.subf %37, %44 : vector<8x64xf32>
    %46 = arith.mulf %45, %45 : vector<8x64xf32>
    %cst_27 = arith.constant dense<0.000000e+00> : vector<8xf32>
    %47 = vector.multi_reduction <add>, %46, %cst_27 [1] : vector<8x64xf32> to vector<8xf32>
    %48 = vector.shape_cast %47 : vector<8xf32> to vector<8x1xf32>
    %cst_28 = arith.constant 6.400000e+01 : f32
    %49 = vector.broadcast %cst_28 : f32 to vector<8x1xf32>
    %50 = arith.divf %48, %49 : vector<8x1xf32>
    %cst_29 = arith.constant 9.99999974E-6 : f32
    %51 = vector.broadcast %cst_29 : f32 to vector<8x1xf32>
    %52 = arith.addf %50, %51 : vector<8x1xf32>
    %53 = math.rsqrt %52 : vector<8x1xf32>
    %54 = vector.broadcast %53 : vector<8x1xf32> to vector<8x64xf32>
    %55 = arith.mulf %45, %54 : vector<8x64xf32>
    %56 = vector.broadcast %38 : vector<1x64xf32> to vector<8x64xf32>
    %57 = arith.mulf %55, %56 : vector<8x64xf32>
    %58 = vector.broadcast %39 : vector<1x64xf32> to vector<8x64xf32>
    %59 = arith.addf %57, %58 : vector<8x64xf32>
    %60 = arith.truncf %59 : vector<8x64xf32> to vector<8x64xbf16>
    %c0_30 = arith.constant 0 : index
    %c0_31 = arith.constant 0 : index
    %61 = vector.load %arg10[%c0_30, %c0_31] : memref<64x16xbf16, #tpu.memory_space<vmem>>, vector<64x16xbf16>
    %cst_32 = arith.constant dense<0.000000e+00> : vector<8x16xf32>
    %62 = tpu.matmul %60, %61, %cst_32 {dimension_numbers = #tpu.dot_dimension_numbers<[1], [0], [0], [1], [0, 0, 1, 1], [], []>} : vector<8x64xbf16>, vector<64x16xbf16>, vector<8x16xf32> -> vector<8x16xf32>
    %c0_33 = arith.constant 0 : index
    %c0_34 = arith.constant 0 : index
    %63 = vector.load %arg11[%c0_33, %c0_34] : memref<1x16xf32, #tpu.memory_space<vmem>>, vector<1x16xf32>
    %64 = vector.broadcast %63 : vector<1x16xf32> to vector<8x16xf32>
    %65 = arith.addf %62, %64 : vector<8x16xf32>
    %66 = tpu.iota {dimensions = array<i32: 1>} : vector<8x16xi32>
    %c6_i32 = arith.constant 6 : i32
    %67 = vector.broadcast %c6_i32 : i32 to vector<8x16xi32>
    %68 = arith.cmpi sge, %66, %67 : vector<8x16xi32>
    %c10_i32 = arith.constant 10 : i32
    %69 = vector.broadcast %c10_i32 : i32 to vector<8x16xi32>
    %70 = arith.cmpi slt, %66, %69 : vector<8x16xi32>
    %71 = arith.andi %68, %70 : vector<8x16xi1>
    %c1_i32 = arith.constant 1 : i32
    %72 = vector.broadcast %c1_i32 : i32 to vector<8x16xi32>
    %73 = arith.cmpi eq, %66, %72 : vector<8x16xi32>
    %c10_i32_35 = arith.constant 10 : i32
    %74 = vector.broadcast %c10_i32_35 : i32 to vector<8x16xi32>
    %75 = arith.cmpi eq, %66, %74 : vector<8x16xi32>
    %76 = arith.ori %73, %75 : vector<8x16xi1>
    %cst_36 = arith.constant 0xFF800000 : f32
    %77 = vector.broadcast %cst_36 : f32 to vector<8x16xf32>
    %78 = arith.select %71, %65, %77 : vector<8x16xi1>, vector<8x16xf32>
    %cst_37 = arith.constant dense<0xFF800000> : vector<8xf32>
    %79 = vector.multi_reduction <maximumf>, %78, %cst_37 [1] : vector<8x16xf32> to vector<8xf32>
    %80 = vector.shape_cast %79 : vector<8xf32> to vector<8x1xf32>
    %81 = vector.broadcast %80 : vector<8x1xf32> to vector<8x16xf32>
    %82 = arith.subf %78, %81 : vector<8x16xf32>
    %83 = math.exp %82 : vector<8x16xf32>
    %cst_38 = arith.constant dense<0.000000e+00> : vector<8xf32>
    %84 = vector.multi_reduction <add>, %83, %cst_38 [1] : vector<8x16xf32> to vector<8xf32>
    %85 = vector.shape_cast %84 : vector<8xf32> to vector<8x1xf32>
    %86 = vector.broadcast %85 : vector<8x1xf32> to vector<8x16xf32>
    %87 = arith.divf %83, %86 : vector<8x16xf32>
    %88 = arith.negf %65 : vector<8x16xf32>
    %89 = math.exp %88 : vector<8x16xf32>
    %cst_39 = arith.constant 1.000000e+00 : f32
    %90 = vector.broadcast %cst_39 : f32 to vector<8x16xf32>
    %91 = arith.addf %90, %89 : vector<8x16xf32>
    %92 = arith.divf %90, %91 : vector<8x16xf32>
    %93 = arith.select %76, %92, %65 : vector<8x16xi1>, vector<8x16xf32>
    %94 = arith.select %71, %87, %93 : vector<8x16xi1>, vector<8x16xf32>
    %c0_40 = arith.constant 0 : index
    %c0_41 = arith.constant 0 : index
    %95 = vector.load %arg12[%c0_40, %c0_41] : memref<8x16xf32, #tpu.memory_space<vmem>>, vector<8x16xf32>
    tpu.vector_store %arg12[%c0_40, %c0_41], %94 {strides = array<i32>} : memref<8x16xf32, #tpu.memory_space<vmem>>, vector<8x16xf32>,
    return
  }
  func.func @transform_0(%arg0: i32) -> (i32, i32) {
    %c0_i32 = arith.constant 0 : i32
    %c0_i32_0 = arith.constant 0 : i32
    return %arg0, %c0_i32 : i32, i32
  }
  func.func @transform_1(%arg0: i32) -> (i32, i32) {
    %c0_i32 = arith.constant 0 : i32
    %c0_i32_0 = arith.constant 0 : i32
    %c0_i32_1 = arith.constant 0 : i32
    return %c0_i32, %c0_i32_0 : i32, i32
  }
  func.func @transform_2(%arg0: i32) -> (i32, i32) {
    %c0_i32 = arith.constant 0 : i32
    %c0_i32_0 = arith.constant 0 : i32
    %c0_i32_1 = arith.constant 0 : i32
    return %c0_i32, %c0_i32_0 : i32, i32
  }
  func.func @transform_3(%arg0: i32) -> (i32, i32) {
    %c0_i32 = arith.constant 0 : i32
    %c0_i32_0 = arith.constant 0 : i32
    %c0_i32_1 = arith.constant 0 : i32
    return %c0_i32, %c0_i32_0 : i32, i32
  }
  func.func @transform_4(%arg0: i32) -> (i32, i32) {
    %c0_i32 = arith.constant 0 : i32
    %c0_i32_0 = arith.constant 0 : i32
    %c0_i32_1 = arith.constant 0 : i32
    return %c0_i32, %c0_i32_0 : i32, i32
  }
  func.func @transform_5(%arg0: i32) -> (i32, i32) {
    %c0_i32 = arith.constant 0 : i32
    %c0_i32_0 = arith.constant 0 : i32
    %c0_i32_1 = arith.constant 0 : i32
    return %c0_i32, %c0_i32_0 : i32, i32
  }
  func.func @transform_6(%arg0: i32) -> (i32, i32) {
    %c0_i32 = arith.constant 0 : i32
    %c0_i32_0 = arith.constant 0 : i32
    %c0_i32_1 = arith.constant 0 : i32
    return %c0_i32, %c0_i32_0 : i32, i32
  }
  func.func @transform_7(%arg0: i32) -> (i32, i32) {
    %c0_i32 = arith.constant 0 : i32
    %c0_i32_0 = arith.constant 0 : i32
    %c0_i32_1 = arith.constant 0 : i32
    return %c0_i32, %c0_i32_0 : i32, i32
  }
  func.func @transform_8(%arg0: i32) -> (i32, i32) {
    %c0_i32 = arith.constant 0 : i32
    %c0_i32_0 = arith.constant 0 : i32
    %c0_i32_1 = arith.constant 0 : i32
    return %c0_i32, %c0_i32_0 : i32, i32
  }
  func.func @transform_9(%arg0: i32) -> (i32, i32) {
    %c0_i32 = arith.constant 0 : i32
    %c0_i32_0 = arith.constant 0 : i32
    %c0_i32_1 = arith.constant 0 : i32
    return %c0_i32, %c0_i32_0 : i32, i32
  }
  func.func @transform_10(%arg0: i32) -> (i32, i32) {
    %c0_i32 = arith.constant 0 : i32
    %c0_i32_0 = arith.constant 0 : i32
    %c0_i32_1 = arith.constant 0 : i32
    return %c0_i32, %c0_i32_0 : i32, i32
  }
  func.func @transform_11(%arg0: i32) -> (i32, i32) {
    %c0_i32 = arith.constant 0 : i32
    %c0_i32_0 = arith.constant 0 : i32
    return %arg0, %c0_i32 : i32, i32
  }
}

</mosaic_0001>

<llo_original>
// kernel: tpu_custom_call.1
$region0: #{tpu_custom_call.1}
  #allocation0 [shape = 'u32[]', space=smem, size = 0x4, offset = 0x4, fixed_abs, tag = 'smem constant byte address 0x4 - core index']
  #allocation1 [shape = 'u32[144,128]{1,0:T(1,128)}', space=vmem, size = 0x12000, scoped, tag = 'internal scratch']
  %s0 = inlined_call_operand.vmem [shape: bf16[2,256], index: 0, kind: input, shape index: {}]
  %s1 = inlined_call_operand.vmem [shape: bf16[256,128], index: 1, kind: input, shape index: {}]
  %s2 = inlined_call_operand.vmem [shape: f32[1,128], index: 2, kind: input, shape index: {}]
  %s3 = inlined_call_operand.vmem [shape: f32[1,128], index: 3, kind: input, shape index: {}]
  %s4 = inlined_call_operand.vmem [shape: f32[1,128], index: 4, kind: input, shape index: {}]
  %s5 = inlined_call_operand.vmem [shape: bf16[128,64], index: 5, kind: input, shape index: {}]
  %s6 = inlined_call_operand.vmem [shape: f32[1,64], index: 6, kind: input, shape index: {}]
  %s7 = inlined_call_operand.vmem [shape: f32[1,64], index: 7, kind: input, shape index: {}]
  %s8 = inlined_call_operand.vmem [shape: f32[1,64], index: 8, kind: input, shape index: {}]
  %s9 = inlined_call_operand.vmem [shape: bf16[64,16], index: 9, kind: input, shape index: {}]
  %s10 = inlined_call_operand.vmem [shape: f32[1,16], index: 10, kind: input, shape index: {}]
  %s11 = inlined_call_operand.hbm [shape: f32[2,16], index: 11, kind: output, shape index: {}]
  %s12 = sld [smem:[#allocation0]]
  $region54: #{tpu_custom_call.1} parent=0
    _
  %s14 = ssub.s32 1, %s12
  %s15 = scalar_select 0, %s14, %s12
  $region1: #{tpu_custom_call.1} parent=0
    #allocation2 [shape = 'u8[4096]{0}', space=vmem, size = 0x1000, scoped, tag = 'output window, operand 0, single buffered']
    #allocation3 [shape = 's32[1]{0}', space=sflag, size = 0x4, scoped, tag = 'scoped memory for tpu_custom_call.1']
    %16 = vsyncpa [#allocation3], 0
    // Predicated region
    $region2: #{tpu_custom_call.1} parent=1 // pred_check
      _
    $region3: #{tpu_custom_call.1} parent=1 // pred_check_branch
      %18 = sbr.rel (0) target = $region5
    $region4: #{tpu_custom_call.1} parent=1 // pred_region
      _
    $region5: #{tpu_custom_call.1} parent=1 // pred_fallthru
      _
    // Predicated region
    $region6: #{tpu_custom_call.1} parent=1 // pred_check
      _
    $region7: #{tpu_custom_call.1} parent=1 // pred_check_branch
      %20 = sbr.rel (0) target = $region9
    $region8: #{tpu_custom_call.1} parent=1 // pred_region
      _
    $region9: #{tpu_custom_call.1} parent=1 // pred_fallthru
      _
    // Predicated region
    $region10: #{tpu_custom_call.1} parent=1 // pred_check
      _
    $region11: #{tpu_custom_call.1} parent=1 // pred_check_branch
      %22 = sbr.rel (0) target = $region13
    $region12: #{tpu_custom_call.1} parent=1 // pred_region
      _
    $region13: #{tpu_custom_call.1} parent=1 // pred_fallthru
      _
    // Predicated region
    $region14: #{tpu_custom_call.1} parent=1 // pred_check
      _
    $region15: #{tpu_custom_call.1} parent=1 // pred_check_branch
      %24 = sbr.rel (0) target = $region17
    $region16: #{tpu_custom_call.1} parent=1 // pred_region
      _
    $region17: #{tpu_custom_call.1} parent=1 // pred_fallthru
      _
    // Predicated region
    $region18: #{tpu_custom_call.1} parent=1 // pred_check
      _
    $region19: #{tpu_custom_call.1} parent=1 // pred_check_branch
      %26 = sbr.rel (0) target = $region21
    $region20: #{tpu_custom_call.1} parent=1 // pred_region
      _
    $region21: #{tpu_custom_call.1} parent=1 // pred_fallthru
      _
    // Predicated region
    $region22: #{tpu_custom_call.1} parent=1 // pred_check
      _
    $region23: #{tpu_custom_call.1} parent=1 // pred_check_branch
      %28 = sbr.rel (0) target = $region25
    $region24: #{tpu_custom_call.1} parent=1 // pred_region
      _
    $region25: #{tpu_custom_call.1} parent=1 // pred_fallthru
      _
    // Predicated region
    $region26: #{tpu_custom_call.1} parent=1 // pred_check
      _
    $region27: #{tpu_custom_call.1} parent=1 // pred_check_branch
      %30 = sbr.rel (0) target = $region29
    $region28: #{tpu_custom_call.1} parent=1 // pred_region
      _
    $region29: #{tpu_custom_call.1} parent=1 // pred_fallthru
      _
    // Predicated region
    $region30: #{tpu_custom_call.1} parent=1 // pred_check
      _
    $region31: #{tpu_custom_call.1} parent=1 // pred_check_branch
      %32 = sbr.rel (0) target = $region33
    $region32: #{tpu_custom_call.1} parent=1 // pred_region
      _
    $region33: #{tpu_custom_call.1} parent=1 // pred_fallthru
      _
    // Predicated region
    $region34: #{tpu_custom_call.1} parent=1 // pred_check
      _
    $region35: #{tpu_custom_call.1} parent=1 // pred_check_branch
      %34 = sbr.rel (0) target = $region37
    $region36: #{tpu_custom_call.1} parent=1 // pred_region
      _
    $region37: #{tpu_custom_call.1} parent=1 // pred_fallthru
      _
    // Predicated region
    $region38: #{tpu_custom_call.1} parent=1 // pred_check
      _
    $region39: #{tpu_custom_call.1} parent=1 // pred_check_branch
      %36 = sbr.rel (0) target = $region41
    $region40: #{tpu_custom_call.1} parent=1 // pred_region
      _
    $region41: #{tpu_custom_call.1} parent=1 // pred_fallthru
      _
    // Predicated region
    $region42: #{tpu_custom_call.1} parent=1 // pred_check
      _
    $region43: #{tpu_custom_call.1} parent=1 // pred_check_branch
      %38 = sbr.rel (0) target = $region45
    $region44: #{tpu_custom_call.1} parent=1 // pred_region
      _
    $region45: #{tpu_custom_call.1} parent=1 // pred_fallthru
      _
    %v40 = vld [vmem:[%s0] sm:$0x3]
    %v41 = vld [vmem:[%s0 + $0x2] sm:$0x3]
    %v42 = vld [vmem:[%s0 + $0x4] sm:$0x3]
    %v43 = vld [vmem:[%s0 + $0x6] sm:$0x3]
    %v44 = vld [vmem:[%s1] sm:$0xf]
    %v45 = vld [vmem:[%s1 + $0x4] sm:$0xf]
    %v46 = vld [vmem:[%s1 + $0x8] sm:$0xf]
    %v47 = vld [vmem:[%s1 + $0xc] sm:$0xf]
    %v48 = vld [vmem:[%s1 + $0x10] sm:$0xf]
    %v49 = vld [vmem:[%s1 + $0x14] sm:$0xf]
    %v50 = vld [vmem:[%s1 + $0x18] sm:$0xf]
    %v51 = vld [vmem:[%s1 + $0x1c] sm:$0xf]
    %v52 = vld [vmem:[%s1 + $0x20] sm:$0xf]
    %v53 = vld [vmem:[%s1 + $0x24] sm:$0xf]
    %v54 = vld [vmem:[%s1 + $0x28] sm:$0xf]
    %v55 = vld [vmem:[%s1 + $0x2c] sm:$0xf]
    %v56 = vld [vmem:[%s1 + $0x30] sm:$0xf]
    %v57 = vld [vmem:[%s1 + $0x34] sm:$0xf]
    %v58 = vld [vmem:[%s1 + $0x38] sm:$0xf]
    %v59 = vld [vmem:[%s1 + $0x3c] sm:$0xf]
    %v60 = vld [vmem:[%s1 + $0x40] sm:$0xf]
    %v61 = vld [vmem:[%s1 + $0x44] sm:$0xf]
    %v62 = vld [vmem:[%s1 + $0x48] sm:$0xf]
    %v63 = vld [vmem:[%s1 + $0x4c] sm:$0xf]
    %v64 = vld [vmem:[%s1 + $0x50] sm:$0xf]
    %v65 = vld [vmem:[%s1 + $0x54] sm:$0xf]
    %v66 = vld [vmem:[%s1 + $0x58] sm:$0xf]
    %v67 = vld [vmem:[%s1 + $0x5c] sm:$0xf]
    %v68 = vld [vmem:[%s1 + $0x60] sm:$0xf]
    %v69 = vld [vmem:[%s1 + $0x64] sm:$0xf]
    %v70 = vld [vmem:[%s1 + $0x68] sm:$0xf]
    %v71 = vld [vmem:[%s1 + $0x6c] sm:$0xf]
    %v72 = vld [vmem:[%s1 + $0x70] sm:$0xf]
    %v73 = vld [vmem:[%s1 + $0x74] sm:$0xf]
    %v74 = vld [vmem:[%s1 + $0x78] sm:$0xf]
    %v75 = vld [vmem:[%s1 + $0x7c] sm:$0xf]
    %v76 = vld [vmem:[%s2] sm:$0x1]
    %v78 = vlaneseq
    %v79 = vshrl.u32 %v78, 7
    %v80 = vsub.s32 0, %v79
    %v81 = vrot.slane %v76, %v80
    %v87 = vcombine.low %v40, %v41
    %v88 = vcombine.low %v42, %v43
    %v90 = vunpack.c.l.s4 1966171168
    %v91 = vunpack.c.0.s8 %v90
    %v92 = vlaneseq
    %v93 = vshrl.u32 %v92, 7
    %v94 = vsub.s32 %v91, %v93
    %v95 = vrot.slane %v87, %v94
    %v97 = vunpack.c.l.s4 1966171168
    %v98 = vunpack.c.0.s8 %v97
    %v99 = vlaneseq
    %v100 = vshrl.u32 %v99, 7
    %v101 = vsub.s32 %v98, %v100
    %v102 = vrot.slane %v88, %v101
    %v103 = vcombine.low %v95, %v102
    %v104 = vcombine.high %v95, %v102
    %v106 = vunpack.c.l.s4 1966171168
    %v107 = vunpack.c.0.s8 %v106
    %v108 = vlaneseq
    %v109 = vshrl.u32 %v108, 7
    %v110 = vsub.s32 %v107, %v109
    %v111 = vrot.slane %v103, %v110
    %v113 = vunpack.c.l.s4 1966171168
    %v114 = vunpack.c.0.s8 %v113
    %v115 = vlaneseq
    %v116 = vshrl.u32 %v115, 7
    %v117 = vsub.s32 %v114, %v116
    %v118 = vrot.slane %v104, %v117
    %v153 = vunpack.c.l.b16 %v44
    %v154 = vunpack.c.l.b16 %v45
    %v155 = vunpack.c.l.b16 %v46
    %v156 = vunpack.c.l.b16 %v47
    %v157 = vunpack.c.l.b16 %v48
    %v158 = vunpack.c.l.b16 %v49
    %v159 = vunpack.c.l.b16 %v50
    %v160 = vunpack.c.l.b16 %v51
    %v161 = vunpack.c.l.b16 %v52
    %v162 = vunpack.c.l.b16 %v53
    %v163 = vunpack.c.l.b16 %v54
    %v164 = vunpack.c.l.b16 %v55
    %v165 = vunpack.c.l.b16 %v56
    %v166 = vunpack.c.l.b16 %v57
    %v167 = vunpack.c.l.b16 %v58
    %v168 = vunpack.c.l.b16 %v59
    %v169 = vunpack.c.l.b16 %v60
    %v170 = vunpack.c.l.b16 %v61
    %v171 = vunpack.c.l.b16 %v62
    %v172 = vunpack.c.l.b16 %v63
    %v173 = vunpack.c.l.b16 %v64
    %v174 = vunpack.c.l.b16 %v65
    %v175 = vunpack.c.l.b16 %v66
    %v176 = vunpack.c.l.b16 %v67
    %v177 = vunpack.c.l.b16 %v68
    %v178 = vunpack.c.l.b16 %v69
    %v179 = vunpack.c.l.b16 %v70
    %v180 = vunpack.c.l.b16 %v71
    %v181 = vunpack.c.l.b16 %v72
    %v182 = vunpack.c.l.b16 %v73
    %v183 = vunpack.c.l.b16 %v74
    %v184 = vunpack.c.l.b16 %v75
    %v185 = vpack.c.b16 %v154, %v153
    %v186 = vpack.c.b16 %v156, %v155
    %v187 = vpack.c.b16 %v158, %v157
    %v188 = vpack.c.b16 %v160, %v159
    %v189 = vpack.c.b16 %v162, %v161
    %v190 = vpack.c.b16 %v164, %v163
    %v191 = vpack.c.b16 %v166, %v165
    %v192 = vpack.c.b16 %v168, %v167
    %v193 = vpack.c.b16 %v170, %v169
    %v194 = vpack.c.b16 %v172, %v171
    %v195 = vpack.c.b16 %v174, %v173
    %v196 = vpack.c.b16 %v176, %v175
    %v197 = vpack.c.b16 %v178, %v177
    %v198 = vpack.c.b16 %v180, %v179
    %v199 = vpack.c.b16 %v182, %v181
    %v200 = vpack.c.b16 %v184, %v183
    %217 = vmatprep.subr.bf16.mxu0 0
    %218 = vmatpush1.bf16.msra.mxu0 %v185
    %219 = vmatprep.subr.bf16.mxu0 0
    %220 = vmatpush1.bf16.msra.mxu0 %v186
    %221 = vmatprep.subr.bf16.mxu0 0
    %222 = vmatpush1.bf16.msra.mxu0 %v187
    %223 = vmatprep.subr.bf16.mxu0 0
    %224 = vmatpush1.bf16.msra.mxu0 %v188
    %225 = vmatprep.subr.bf16.mxu0 0
    %226 = vmatpush1.bf16.msra.mxu0 %v189
    %227 = vmatprep.subr.bf16.mxu0 0
    %228 = vmatpush1.bf16.msra.mxu0 %v190
    %229 = vmatprep.subr.bf16.mxu0 0
    %230 = vmatpush1.bf16.msra.mxu0 %v191
    %231 = vmatprep.subr.bf16.mxu0 0
    %232 = vmatpush1.bf16.msra.mxu0 %v192
    %233 = vmatprep.subr.bf16.mxu0 0
    %234 = vmatpush1.bf16.msra.mxu0 %v193
    %235 = vmatprep.subr.bf16.mxu0 0
    %236 = vmatpush1.bf16.msra.mxu0 %v194
    %237 = vmatprep.subr.bf16.mxu0 0
    %238 = vmatpush1.bf16.msra.mxu0 %v195
    %239 = vmatprep.subr.bf16.mxu0 0
    %240 = vmatpush1.bf16.msra.mxu0 %v196
    %241 = vmatprep.subr.bf16.mxu0 0
    %242 = vmatpush1.bf16.msra.mxu0 %v197
    %243 = vmatprep.subr.bf16.mxu0 0
    %244 = vmatpush1.bf16.msra.mxu0 %v198
    %245 = vmatprep.subr.bf16.mxu0 0
    %246 = vmatpush1.bf16.msra.mxu0 %v199
    %247 = vmatprep.subr.bf16.mxu0 0
    %248 = vmatpush1.bf16.msra.mxu0 %v200
    %249 = vmatprep.mubr.bf16.mxu0 %v118
    %250 = vmatmul.mubr.bf16.gmra.mrb[0].mxu0 %v111
    %v251 = vpop.f32.mrb[0].mxu0
    %v252 = vadd.f32 %v81, %v251
    %v253 = vpop.f32.mrb[0].mxu0
    %v254 = vpop.f32.mrb[0].mxu0
    %v255 = vpop.f32.mrb[0].mxu0
    %256 = vdwg.mxu0
    %v257 = vmax.f32 %v252, 0.0
    %v258 = vld [vmem:[%s3] sm:$0x1]
    %v259 = vld [vmem:[%s4] sm:$0x1]
    %260 = vadd.xlane.f32.xlu0 %v257
    %v261 = vpop.xlane.xlu0 %260
    %v262 = vrcp.pop 128.0
    %v263 = vmul.f32 %v261, %v262
    %v264 = vsub.f32 %v257, %v263
    %v265 = vmul.f32 %v264, %v264
    %266 = vadd.xlane.f32.xlu0 %v265
    %v267 = vpop.xlane.xlu0 %266
    %v268 = vmul.f32 %v267, %v262
    %v269 = vadd.f32 %v268, 1e-05
    %v270 = vrsqrt.pop %v269
    %v271 = vmul.f32 %v264, %v270
    %v273 = vlaneseq
    %v274 = vshrl.u32 %v273, 7
    %v275 = vsub.s32 0, %v274
    %v276 = vrot.slane %v258, %v275
    %v278 = vmul.f32 %v271, %v276
    %v280 = vlaneseq
    %v281 = vshrl.u32 %v280, 7
    %v282 = vsub.s32 0, %v281
    %v283 = vrot.slane %v259, %v282
    %v285 = vadd.f32 %v278, %v283
    %v286 = vpack.c.bf16 %v285, %v285
    %v287 = vld [vmem:[%s5] sm:$0xf]
    %v288 = vld [vmem:[%s5 + $0x4] sm:$0xf]
    %v289 = vld [vmem:[%s5 + $0x8] sm:$0xf]
    %v290 = vld [vmem:[%s5 + $0xc] sm:$0xf]
    %v291 = vld [vmem:[%s5 + $0x10] sm:$0xf]
    %v292 = vld [vmem:[%s5 + $0x14] sm:$0xf]
    %v293 = vld [vmem:[%s5 + $0x18] sm:$0xf]
    %v294 = vld [vmem:[%s5 + $0x1c] sm:$0xf]
    %v295 = vld [vmem:[%s5 + $0x20] sm:$0xf]
    %v296 = vld [vmem:[%s5 + $0x24] sm:$0xf]
    %v297 = vld [vmem:[%s5 + $0x28] sm:$0xf]
    %v298 = vld [vmem:[%s5 + $0x2c] sm:$0xf]
    %v299 = vld [vmem:[%s5 + $0x30] sm:$0xf]
    %v300 = vld [vmem:[%s5 + $0x34] sm:$0xf]
    %v301 = vld [vmem:[%s5 + $0x38] sm:$0xf]
    %v302 = vld [vmem:[%s5 + $0x3c] sm:$0xf]
    %v303 = vld [vmem:[%s6] sm:$0x1]
    %v305 = vlaneseq
    %v306 = vshrl.u32 %v305, 7
    %v307 = vsub.s32 0, %v306
    %v308 = vrot.slane %v303, %v307
    %v326 = vunpack.c.l.b16 %v287
    %v327 = vunpack.c.l.b16 %v288
    %v328 = vunpack.c.l.b16 %v289
    %v329 = vunpack.c.l.b16 %v290
    %v330 = vunpack.c.l.b16 %v291
    %v331 = vunpack.c.l.b16 %v292
    %v332 = vunpack.c.l.b16 %v293
    %v333 = vunpack.c.l.b16 %v294
    %v334 = vunpack.c.l.b16 %v295
    %v335 = vunpack.c.l.b16 %v296
    %v336 = vunpack.c.l.b16 %v297
    %v337 = vunpack.c.l.b16 %v298
    %v338 = vunpack.c.l.b16 %v299
    %v339 = vunpack.c.l.b16 %v300
    %v340 = vunpack.c.l.b16 %v301
    %v341 = vunpack.c.l.b16 %v302
    %v342 = vpack.c.b16 %v327, %v326
    %v343 = vpack.c.b16 %v329, %v328
    %v344 = vpack.c.b16 %v331, %v330
    %v345 = vpack.c.b16 %v333, %v332
    %v346 = vpack.c.b16 %v335, %v334
    %v347 = vpack.c.b16 %v337, %v336
    %v348 = vpack.c.b16 %v339, %v338
    %v349 = vpack.c.b16 %v341, %v340
    %358 = vmatprep.subr.bf16.mxu0 0
    %359 = vmatpush1.bf16.msra.mxu0 %v342
    %360 = vmatprep.subr.bf16.mxu0 0
    %361 = vmatpush1.bf16.msra.mxu0 %v343
    %362 = vmatprep.subr.bf16.mxu0 0
    %363 = vmatpush1.bf16.msra.mxu0 %v344
    %364 = vmatprep.subr.bf16.mxu0 0
    %365 = vmatpush1.bf16.msra.mxu0 %v345
    %366 = vmatprep.subr.bf16.mxu0 0
    %367 = vmatpush1.bf16.msra.mxu0 %v346
    %368 = vmatprep.subr.bf16.mxu0 0
    %369 = vmatpush1.bf16.msra.mxu0 %v347
    %370 = vmatprep.subr.bf16.mxu0 0
    %371 = vmatpush1.bf16.msra.mxu0 %v348
    %372 = vmatprep.subr.bf16.mxu0 0
    %373 = vmatpush1.bf16.msra.mxu0 %v349
    %374 = vmatprep.subr.bf16.mxu0 0
    %375 = vmatpush1.bf16.msra.mxu0 0
    %376 = vmatprep.subr.bf16.mxu0 0
    %377 = vmatpush1.bf16.msra.mxu0 0
    %378 = vmatprep.subr.bf16.mxu0 0
    %379 = vmatpush1.bf16.msra.mxu0 0
    %380 = vmatprep.subr.bf16.mxu0 0
    %381 = vmatpush1.bf16.msra.mxu0 0
    %382 = vmatprep.subr.bf16.mxu0 0
    %383 = vmatpush1.bf16.msra.mxu0 0
    %384 = vmatprep.subr.bf16.mxu0 0
    %385 = vmatpush1.bf16.msra.mxu0 0
    %386 = vmatprep.subr.bf16.mxu0 0
    %387 = vmatpush1.bf16.msra.mxu0 0
    %388 = vmatprep.subr.bf16.mxu0 0
    %389 = vmatpush1.bf16.msra.mxu0 0
    %390 = vmatprep.mubr.bf16.mxu0 0
    %391 = vmatmul.mubr.bf16.gmra.mrb[0].mxu0 %v286
    %v392 = vpop.f32.mrb[0].mxu0
    %v393 = vadd.f32 %v308, %v392
    %v394 = vpop.f32.mrb[0].mxu0
    %v395 = vpop.f32.mrb[0].mxu0
    %v396 = vpop.f32.mrb[0].mxu0
    %397 = vdwg.mxu0
    %v398 = vmax.f32 %v393, 0.0
    %v399 = vld [vmem:[%s7] sm:$0x1]
    %v400 = vld [vmem:[%s8] sm:$0x1]
    %vm401 = vcmask 523264
    %v402 = vsel %vm401, %v398, 0.0
    %403 = vadd.xlane.f32.xlu0 %v402
    %v404 = vpop.xlane.xlu0 %403
    %v405 = vrcp.pop 64.0
    %v406 = vmul.f32 %v404, %v405
    %v407 = vsub.f32 %v398, %v406
    %v408 = vmul.f32 %v407, %v407
    %v409 = vsel %vm401, %v408, 0.0
    %410 = vadd.xlane.f32.xlu0 %v409
    %v411 = vpop.xlane.xlu0 %410
    %v412 = vmul.f32 %v411, %v405
    %v413 = vadd.f32 %v412, 1e-05
    %v414 = vrsqrt.pop %v413
    %v415 = vmul.f32 %v407, %v414
    %v417 = vlaneseq
    %v418 = vshrl.u32 %v417, 7
    %v419 = vsub.s32 0, %v418
    %v420 = vrot.slane %v399, %v419
    %v422 = vmul.f32 %v415, %v420
    %v424 = vlaneseq
    %v425 = vshrl.u32 %v424, 7
    %v426 = vsub.s32 0, %v425
    %v427 = vrot.slane %v400, %v426
    %v429 = vadd.f32 %v422, %v427
    %v430 = vpack.c.bf16 %v429, %v429
    %v431 = vld [vmem:[%s9] sm:$0xf]
    %v432 = vld [vmem:[%s9 + $0x4] sm:$0xf]
    %v433 = vld [vmem:[%s9 + $0x8] sm:$0xf]
    %v434 = vld [vmem:[%s9 + $0xc] sm:$0xf]
    %v435 = vld [vmem:[%s9 + $0x10] sm:$0xf]
    %v436 = vld [vmem:[%s9 + $0x14] sm:$0xf]
    %v437 = vld [vmem:[%s9 + $0x18] sm:$0xf]
    %v438 = vld [vmem:[%s9 + $0x1c] sm:$0xf]
    %v439 = vld [vmem:[%s10] sm:$0x1]
    %v441 = vlaneseq
    %v442 = vshrl.u32 %v441, 7
    %v443 = vsub.s32 0, %v442
    %v444 = vrot.slane %v439, %v443
    %v454 = vunpack.c.l.b16 %v431
    %v455 = vunpack.c.l.b16 %v432
    %v456 = vunpack.c.l.b16 %v433
    %v457 = vunpack.c.l.b16 %v434
    %v458 = vunpack.c.l.b16 %v435
    %v459 = vunpack.c.l.b16 %v436
    %v460 = vunpack.c.l.b16 %v437
    %v461 = vunpack.c.l.b16 %v438
    %v462 = vpack.c.b16 %v455, %v454
    %v463 = vpack.c.b16 %v457, %v456
    %v464 = vpack.c.b16 %v459, %v458
    %v465 = vpack.c.b16 %v461, %v460
    %v471 = vsel %vm401, %v430, 0
    %473 = vmatprep.subr.bf16.mxu0 0
    %474 = vmatpush1.bf16.msra.mxu0 %v462
    %475 = vmatprep.subr.bf16.mxu0 0
    %476 = vmatpush1.bf16.msra.mxu0 %v463
    %477 = vmatprep.subr.bf16.mxu0 0
    %478 = vmatpush1.bf16.msra.mxu0 %v464
    %479 = vmatprep.subr.bf16.mxu0 0
    %480 = vmatpush1.bf16.msra.mxu0 %v465
    %481 = vmatprep.subr.bf16.mxu0 0
    %482 = vmatpush1.bf16.msra.mxu0 0
    %483 = vmatprep.subr.bf16.mxu0 0
    %484 = vmatpush1.bf16.msra.mxu0 0
    %485 = vmatprep.subr.bf16.mxu0 0
    %486 = vmatpush1.bf16.msra.mxu0 0
    %487 = vmatprep.subr.bf16.mxu0 0
    %488 = vmatpush1.bf16.msra.mxu0 0
    %489 = vmatprep.subr.bf16.mxu0 0
    %490 = vmatpush1.bf16.msra.mxu0 0
    %491 = vmatprep.subr.bf16.mxu0 0
    %492 = vmatpush1.bf16.msra.mxu0 0
    %493 = vmatprep.subr.bf16.mxu0 0
    %494 = vmatpush1.bf16.msra.mxu0 0
    %495 = vmatprep.subr.bf16.mxu0 0
    %496 = vmatpush1.bf16.msra.mxu0 0
    %497 = vmatprep.subr.bf16.mxu0 0
    %498 = vmatpush1.bf16.msra.mxu0 0
    %499 = vmatprep.subr.bf16.mxu0 0
    %500 = vmatpush1.bf16.msra.mxu0 0
    %501 = vmatprep.subr.bf16.mxu0 0
    %502 = vmatpush1.bf16.msra.mxu0 0
    %503 = vmatprep.subr.bf16.mxu0 0
    %504 = vmatpush1.bf16.msra.mxu0 0
    %505 = vmatprep.mubr.bf16.mxu0 0
    %506 = vmatmul.mubr.bf16.gmra.mrb[0].mxu0 %v471
    %v507 = vpop.f32.mrb[0].mxu0
    %v508 = vadd.f32 %v444, %v507
    %v509 = vpop.f32.mrb[0].mxu0
    %v510 = vpop.f32.mrb[0].mxu0
    %v511 = vpop.f32.mrb[0].mxu0
    %512 = vdwg.mxu0
    %v513 = vlaneseq
    %v514 = vand.u32 %v513, 127
    %vm515 = vcmp.ge.s32.totalorder %v514, 6
    %vm516 = vcmp.lt.s32.totalorder %v514, 10
    %vm517 = vmand %vm515, %vm516
    %vm518 = vcmp.eq.s32.totalorder %v514, 1
    %vm519 = vcmp.eq.s32.totalorder %v514, 10
    %vm520 = vmor %vm518, %vm519
    %v521 = vsel %vm517, %v508, -inf
    %vm522 = vcmask 130048
    %v523 = vsel %vm522, %v521, -inf
    %524 = vmax.xlane.f32.xlu0 %v523
    %v525 = vpop.xlane.xlu0 %524
    %v526 = vsub.f32 %v521, %v525
    %v527 = vmul.f32 %v526, 1.442695
    %v528 = vpow.pop %v527
    %v529 = vsel %vm522, %v528, 0.0
    %530 = vadd.xlane.f32.xlu0 %v529
    %v531 = vpop.xlane.xlu0 %530
    %v532 = vrcp.pop %v531
    %v533 = vmul.f32 %v528, %v532
    %v534 = vxor.u32 %v508, 2147483648
    %v535 = vmul.f32 %v534, 1.442695
    %v536 = vpow.pop %v535
    %v537 = vadd.f32 %v536, 1.0
    %v538 = vrcp.pop %v537
    %v539 = vmul.f32 1.0, %v538
    %v540 = vsel %vm520, %v539, %v508
    %v541 = vsel %vm517, %v533, %v540
    %542 = vst.msk [vmem:[#allocation2] sm:$0xff] %vm522, %v541
    // Predicated region
    $region46: #{tpu_custom_call.1} parent=1 // pred_check
      _
    $region47: #{tpu_custom_call.1} parent=1 // pred_check_branch
      %544 = sbr.rel (0) target = $region49
    $region48: #{tpu_custom_call.1} parent=1 // pred_region
      %s546 = ssub.s32 128, 32
      %547 = vsyncadd [#allocation3], %s546
      %s548 = sshll.u32 [#allocation2], 4
      %s549 = int_to_ptr.vmem [resolvable:$true] %s548
      %554 = dma.vmem_to_hbm [thread:$0]  %s549, 32, %s11, [#allocation3], 32, 32, 2
    $region49: #{tpu_custom_call.1} parent=1 // pred_fallthru
      _
    // Predicated region
    $region50: #{tpu_custom_call.1} parent=1 // pred_check
      _
    $region51: #{tpu_custom_call.1} parent=1 // pred_check_branch
      %556 = sbr.rel (0) target = $region53
    $region52: #{tpu_custom_call.1} parent=1 // pred_region
      %557 = dma.done [#allocation3], 128
    $region53: #{tpu_custom_call.1} parent=1 // pred_fallthru
      _
    %558 = vsyncpa [#allocation3], 1

// kernel: tpu_custom_call.1
$region0: #{tpu_custom_call.1}
  #allocation0 [shape = 'u32[]', space=smem, size = 0x4, offset = 0x4, fixed_abs, tag = 'smem constant byte address 0x4 - core index']
  #allocation1 [shape = 'u32[144,128]{1,0:T(1,128)}', space=vmem, size = 0x12000, scoped, tag = 'internal scratch']
  %s0 = inlined_call_operand.vmem [shape: bf16[2,256], index: 0, kind: input, shape index: {}]
  %s1 = inlined_call_operand.vmem [shape: bf16[256,128], index: 1, kind: input, shape index: {}]
  %s2 = inlined_call_operand.vmem [shape: f32[1,128], index: 2, kind: input, shape index: {}]
  %s3 = inlined_call_operand.vmem [shape: f32[1,128], index: 3, kind: input, shape index: {}]
  %s4 = inlined_call_operand.vmem [shape: f32[1,128], index: 4, kind: input, shape index: {}]
  %s5 = inlined_call_operand.vmem [shape: bf16[128,64], index: 5, kind: input, shape index: {}]
  %s6 = inlined_call_operand.vmem [shape: f32[1,64], index: 6, kind: input, shape index: {}]
  %s7 = inlined_call_operand.vmem [shape: f32[1,64], index: 7, kind: input, shape index: {}]
  %s8 = inlined_call_operand.vmem [shape: f32[1,64], index: 8, kind: input, shape index: {}]
  %s9 = inlined_call_operand.vmem [shape: bf16[64,16], index: 9, kind: input, shape index: {}]
  %s10 = inlined_call_operand.vmem [shape: f32[1,16], index: 10, kind: input, shape index: {}]
  %s11 = inlined_call_operand.hbm [shape: f32[2,16], index: 11, kind: output, shape index: {}]
  %s12 = sld [smem:[#allocation0]]
  $region54: #{tpu_custom_call.1} parent=0
    _
  %s14 = ssub.s32 1, %s12
  %s15 = scalar_select 0, %s14, %s12
  $region1: #{tpu_custom_call.1} parent=0
    #allocation2 [shape = 'u8[4096]{0}', space=vmem, size = 0x1000, scoped, tag = 'output window, operand 0, single buffered']
    #allocation3 [shape = 's32[1]{0}', space=sflag, size = 0x4, scoped, tag = 'scoped memory for tpu_custom_call.1']
    %16 = vsyncpa [#allocation3], 0
    // Predicated region
    $region2: #{tpu_custom_call.1} parent=1 // pred_check
      _
    $region3: #{tpu_custom_call.1} parent=1 // pred_check_branch
      %18 = sbr.rel (0) target = $region5
    $region4: #{tpu_custom_call.1} parent=1 // pred_region
      _
    $region5: #{tpu_custom_call.1} parent=1 // pred_fallthru
      _
    // Predicated region
    $region6: #{tpu_custom_call.1} parent=1 // pred_check
      _
    $region7: #{tpu_custom_call.1} parent=1 // pred_check_branch
      %20 = sbr.rel (0) target = $region9
    $region8: #{tpu_custom_call.1} parent=1 // pred_region
      _
    $region9: #{tpu_custom_call.1} parent=1 // pred_fallthru
      _
    // Predicated region
    $region10: #{tpu_custom_call.1} parent=1 // pred_check
      _
    $region11: #{tpu_custom_call.1} parent=1 // pred_check_branch
      %22 = sbr.rel (0) target = $region13
    $region12: #{tpu_custom_call.1} parent=1 // pred_region
      _
    $region13: #{tpu_custom_call.1} parent=1 // pred_fallthru
      _
    // Predicated region
    $region14: #{tpu_custom_call.1} parent=1 // pred_check
      _
    $region15: #{tpu_custom_call.1} parent=1 // pred_check_branch
      %24 = sbr.rel (0) target = $region17
    $region16: #{tpu_custom_call.1} parent=1 // pred_region
      _
    $region17: #{tpu_custom_call.1} parent=1 // pred_fallthru
      _
    // Predicated region
    $region18: #{tpu_custom_call.1} parent=1 // pred_check
      _
    $region19: #{tpu_custom_call.1} parent=1 // pred_check_branch
      %26 = sbr.rel (0) target = $region21
    $region20: #{tpu_custom_call.1} parent=1 // pred_region
      _
    $region21: #{tpu_custom_call.1} parent=1 // pred_fallthru
      _
    // Predicated region
    $region22: #{tpu_custom_call.1} parent=1 // pred_check
      _
    $region23: #{tpu_custom_call.1} parent=1 // pred_check_branch
      %28 = sbr.rel (0) target = $region25
    $region24: #{tpu_custom_call.1} parent=1 // pred_region
      _
    $region25: #{tpu_custom_call.1} parent=1 // pred_fallthru
      _
    // Predicated region
    $region26: #{tpu_custom_call.1} parent=1 // pred_check
      _
    $region27: #{tpu_custom_call.1} parent=1 // pred_check_branch
      %30 = sbr.rel (0) target = $region29
    $region28: #{tpu_custom_call.1} parent=1 // pred_region
      _
    $region29: #{tpu_custom_call.1} parent=1 // pred_fallthru
      _
    // Predicated region
    $region30: #{tpu_custom_call.1} parent=1 // pred_check
      _
    $region31: #{tpu_custom_call.1} parent=1 // pred_check_branch
      %32 = sbr.rel (0) target = $region33
    $region32: #{tpu_custom_call.1} parent=1 // pred_region
      _
    $region33: #{tpu_custom_call.1} parent=1 // pred_fallthru
      _
    // Predicated region
    $region34: #{tpu_custom_call.1} parent=1 // pred_check
      _
    $region35: #{tpu_custom_call.1} parent=1 // pred_check_branch
      %34 = sbr.rel (0) target = $region37
    $region36: #{tpu_custom_call.1} parent=1 // pred_region
      _
    $region37: #{tpu_custom_call.1} parent=1 // pred_fallthru
      _
    // Predicated region
    $region38: #{tpu_custom_call.1} parent=1 // pred_check
      _
    $region39: #{tpu_custom_call.1} parent=1 // pred_check_branch
      %36 = sbr.rel (0) target = $region41
    $region40: #{tpu_custom_call.1} parent=1 // pred_region
      _
    $region41: #{tpu_custom_call.1} parent=1 // pred_fallthru
      _
    // Predicated region
    $region42: #{tpu_custom_call.1} parent=1 // pred_check
      _
    $region43: #{tpu_custom_call.1} parent=1 // pred_check_branch
      %38 = sbr.rel (0) target = $region45
    $region44: #{tpu_custom_call.1} parent=1 // pred_region
      _
    $region45: #{tpu_custom_call.1} parent=1 // pred_fallthru
      _
    %v40 = vld [vmem:[%s0] sm:$0x3]
    %v41 = vld [vmem:[%s0 + $0x2] sm:$0x3]
    %v42 = vld [vmem:[%s0 + $0x4] sm:$0x3]
    %v43 = vld [vmem:[%s0 + $0x6] sm:$0x3]
    %v44 = vld [vmem:[%s1] sm:$0xf]
    %v45 = vld [vmem:[%s1 + $0x4] sm:$0xf]
    %v46 = vld [vmem:[%s1 + $0x8] sm:$0xf]
    %v47 = vld [vmem:[%s1 + $0xc] sm:$0xf]
    %v48 = vld [vmem:[%s1 + $0x10] sm:$0xf]
    %v49 = vld [vmem:[%s1 + $0x14] sm:$0xf]
    %v50 = vld [vmem:[%s1 + $0x18] sm:$0xf]
    %v51 = vld [vmem:[%s1 + $0x1c] sm:$0xf]
    %v52 = vld [vmem:[%s1 + $0x20] sm:$0xf]
    %v53 = vld [vmem:[%s1 + $0x24] sm:$0xf]
    %v54 = vld [vmem:[%s1 + $0x28] sm:$0xf]
    %v55 = vld [vmem:[%s1 + $0x2c] sm:$0xf]
    %v56 = vld [vmem:[%s1 + $0x30] sm:$0xf]
    %v57 = vld [vmem:[%s1 + $0x34] sm:$0xf]
    %v58 = vld [vmem:[%s1 + $0x38] sm:$0xf]
    %v59 = vld [vmem:[%s1 + $0x3c] sm:$0xf]
    %v60 = vld [vmem:[%s1 + $0x40] sm:$0xf]
    %v61 = vld [vmem:[%s1 + $0x44] sm:$0xf]
    %v62 = vld [vmem:[%s1 + $0x48] sm:$0xf]
    %v63 = vld [vmem:[%s1 + $0x4c] sm:$0xf]
    %v64 = vld [vmem:[%s1 + $0x50] sm:$0xf]
    %v65 = vld [vmem:[%s1 + $0x54] sm:$0xf]
    %v66 = vld [vmem:[%s1 + $0x58] sm:$0xf]
    %v67 = vld [vmem:[%s1 + $0x5c] sm:$0xf]
    %v68 = vld [vmem:[%s1 + $0x60] sm:$0xf]
    %v69 = vld [vmem:[%s1 + $0x64] sm:$0xf]
    %v70 = vld [vmem:[%s1 + $0x68] sm:$0xf]
    %v71 = vld [vmem:[%s1 + $0x6c] sm:$0xf]
    %v72 = vld [vmem:[%s1 + $0x70] sm:$0xf]
    %v73 = vld [vmem:[%s1 + $0x74] sm:$0xf]
    %v74 = vld [vmem:[%s1 + $0x78] sm:$0xf]
    %v75 = vld [vmem:[%s1 + $0x7c] sm:$0xf]
    %v76 = vld [vmem:[%s2] sm:$0x1]
    %v78 = vlaneseq
    %v79 = vshrl.u32 %v78, 7
    %v80 = vsub.s32 0, %v79
    %v81 = vrot.slane %v76, %v80
    %v87 = vcombine.low %v40, %v41
    %v88 = vcombine.low %v42, %v43
    %v90 = vunpack.c.l.s4 1966171168
    %v91 = vunpack.c.0.s8 %v90
    %v92 = vlaneseq
    %v93 = vshrl.u32 %v92, 7
    %v94 = vsub.s32 %v91, %v93
    %v95 = vrot.slane %v87, %v94
    %v97 = vunpack.c.l.s4 1966171168
    %v98 = vunpack.c.0.s8 %v97
    %v99 = vlaneseq
    %v100 = vshrl.u32 %v99, 7
    %v101 = vsub.s32 %v98, %v100
    %v102 = vrot.slane %v88, %v101
    %v103 = vcombine.low %v95, %v102
    %v104 = vcombine.high %v95, %v102
    %v106 = vunpack.c.l.s4 1966171168
    %v107 = vunpack.c.0.s8 %v106
    %v108 = vlaneseq
    %v109 = vshrl.u32 %v108, 7
    %v110 = vsub.s32 %v107, %v109
    %v111 = vrot.slane %v103, %v110
    %v113 = vunpack.c.l.s4 1966171168
    %v114 = vunpack.c.0.s8 %v113
    %v115 = vlaneseq
    %v116 = vshrl.u32 %v115, 7
    %v117 = vsub.s32 %v114, %v116
    %v118 = vrot.slane %v104, %v117
    %v153 = vunpack.c.l.b16 %v44
    %v154 = vunpack.c.l.b16 %v45
    %v155 = vunpack.c.l.b16 %v46
    %v156 = vunpack.c.l.b16 %v47
    %v157 = vunpack.c.l.b16 %v48
    %v158 = vunpack.c.l.b16 %v49
    %v159 = vunpack.c.l.b16 %v50
    %v160 = vunpack.c.l.b16 %v51
    %v161 = vunpack.c.l.b16 %v52
    %v162 = vunpack.c.l.b16 %v53
    %v163 = vunpack.c.l.b16 %v54
    %v164 = vunpack.c.l.b16 %v55
    %v165 = vunpack.c.l.b16 %v56
    %v166 = vunpack.c.l.b16 %v57
    %v167 = vunpack.c.l.b16 %v58
    %v168 = vunpack.c.l.b16 %v59
    %v169 = vunpack.c.l.b16 %v60
    %v170 = vunpack.c.l.b16 %v61
    %v171 = vunpack.c.l.b16 %v62
    %v172 = vunpack.c.l.b16 %v63
    %v173 = vunpack.c.l.b16 %v64
    %v174 = vunpack.c.l.b16 %v65
    %v175 = vunpack.c.l.b16 %v66
    %v176 = vunpack.c.l.b16 %v67
    %v177 = vunpack.c.l.b16 %v68
    %v178 = vunpack.c.l.b16 %v69
    %v179 = vunpack.c.l.b16 %v70
    %v180 = vunpack.c.l.b16 %v71
    %v181 = vunpack.c.l.b16 %v72
    %v182 = vunpack.c.l.b16 %v73
    %v183 = vunpack.c.l.b16 %v74
    %v184 = vunpack.c.l.b16 %v75
    %v185 = vpack.c.b16 %v154, %v153
    %v186 = vpack.c.b16 %v156, %v155
    %v187 = vpack.c.b16 %v158, %v157
    %v188 = vpack.c.b16 %v160, %v159
    %v189 = vpack.c.b16 %v162, %v161
    %v190 = vpack.c.b16 %v164, %v163
    %v191 = vpack.c.b16 %v166, %v165
    %v192 = vpack.c.b16 %v168, %v167
    %v193 = vpack.c.b16 %v170, %v169
    %v194 = vpack.c.b16 %v172, %v171
    %v195 = vpack.c.b16 %v174, %v173
    %v196 = vpack.c.b16 %v176, %v175
    %v197 = vpack.c.b16 %v178, %v177
    %v198 = vpack.c.b16 %v180, %v179
    %v199 = vpack.c.b16 %v182, %v181
    %v200 = vpack.c.b16 %v184, %v183
    %217 = vmatprep.subr.bf16.mxu0 0
    %218 = vmatpush1.bf16.msra.mxu0 %v185
    %219 = vmatprep.subr.bf16.mxu0 0
    %220 = vmatpush1.bf16.msra.mxu0 %v186
    %221 = vmatprep.subr.bf16.mxu0 0
    %222 = vmatpush1.bf16.msra.mxu0 %v187
    %223 = vmatprep.subr.bf16.mxu0 0
    %224 = vmatpush1.bf16.msra.mxu0 %v188
    %225 = vmatprep.subr.bf16.mxu0 0
    %226 = vmatpush1.bf16.msra.mxu0 %v189
    %227 = vmatprep.subr.bf16.mxu0 0
    %228 = vmatpush1.bf16.msra.mxu0 %v190
    %229 = vmatprep.subr.bf16.mxu0 0
    %230 = vmatpush1.bf16.msra.mxu0 %v191
    %231 = vmatprep.subr.bf16.mxu0 0
    %232 = vmatpush1.bf16.msra.mxu0 %v192
    %233 = vmatprep.subr.bf16.mxu0 0
    %234 = vmatpush1.bf16.msra.mxu0 %v193
    %235 = vmatprep.subr.bf16.mxu0 0
    %236 = vmatpush1.bf16.msra.mxu0 %v194
    %237 = vmatprep.subr.bf16.mxu0 0
    %238 = vmatpush1.bf16.msra.mxu0 %v195
    %239 = vmatprep.subr.bf16.mxu0 0
    %240 = vmatpush1.bf16.msra.mxu0 %v196
    %241 = vmatprep.subr.bf16.mxu0 0
    %242 = vmatpush1.bf16.msra.mxu0 %v197
    %243 = vmatprep.subr.bf16.mxu0 0
    %244 = vmatpush1.bf16.msra.mxu0 %v198
    %245 = vmatprep.subr.bf16.mxu0 0
    %246 = vmatpush1.bf16.msra.mxu0 %v199
    %247 = vmatprep.subr.bf16.mxu0 0
    %248 = vmatpush1.bf16.msra.mxu0 %v200
    %249 = vmatprep.mubr.bf16.mxu0 %v118
    %250 = vmatmul.mubr.bf16.gmra.mrb[0].mxu0 %v111
    %v251 = vpop.f32.mrb[0].mxu0
    %v252 = vadd.f32 %v81, %v251
    %v253 = vpop.f32.mrb[0].mxu0
    %v254 = vpop.f32.mrb[0].mxu0
    %v255 = vpop.f32.mrb[0].mxu0
    %256 = vdwg.mxu0
    %v257 = vmax.f32 %v252, 0.0
    %v258 = vld [vmem:[%s3] sm:$0x1]
    %v259 = vld [vmem:[%s4] sm:$0x1]
    %260 = vadd.xlane.f32.xlu0 %v257
    %v261 = vpop.xlane.xlu0 %260
    %v262 = vrcp.pop 128.0
    %v263 = vmul.f32 %v261, %v262
    %v264 = vsub.f32 %v257, %v263
    %v265 = vmul.f32 %v264, %v264
    %266 = vadd.xlane.f32.xlu0 %v265
    %v267 = vpop.xlane.xlu0 %266
    %v268 = vmul.f32 %v267, %v262
    %v269 = vadd.f32 %v268, 1e-05
    %v270 = vrsqrt.pop %v269
    %v271 = vmul.f32 %v264, %v270
    %v273 = vlaneseq
    %v274 = vshrl.u32 %v273, 7
    %v275 = vsub.s32 0, %v274
    %v276 = vrot.slane %v258, %v275
    %v278 = vmul.f32 %v271, %v276
    %v280 = vlaneseq
    %v281 = vshrl.u32 %v280, 7
    %v282 = vsub.s32 0, %v281
    %v283 = vrot.slane %v259, %v282
    %v285 = vadd.f32 %v278, %v283
    %v286 = vpack.c.bf16 %v285, %v285
    %v287 = vld [vmem:[%s5] sm:$0xf]
    %v288 = vld [vmem:[%s5 + $0x4] sm:$0xf]
    %v289 = vld [vmem:[%s5 + $0x8] sm:$0xf]
    %v290 = vld [vmem:[%s5 + $0xc] sm:$0xf]
    %v291 = vld [vmem:[%s5 + $0x10] sm:$0xf]
    %v292 = vld [vmem:[%s5 + $0x14] sm:$0xf]
    %v293 = vld [vmem:[%s5 + $0x18] sm:$0xf]
    %v294 = vld [vmem:[%s5 + $0x1c] sm:$0xf]
    %v295 = vld [vmem:[%s5 + $0x20] sm:$0xf]
    %v296 = vld [vmem:[%s5 + $0x24] sm:$0xf]
    %v297 = vld [vmem:[%s5 + $0x28] sm:$0xf]
    %v298 = vld [vmem:[%s5 + $0x2c] sm:$0xf]
    %v299 = vld [vmem:[%s5 + $0x30] sm:$0xf]
    %v300 = vld [vmem:[%s5 + $0x34] sm:$0xf]
    %v301 = vld [vmem:[%s5 + $0x38] sm:$0xf]
    %v302 = vld [vmem:[%s5 + $0x3c] sm:$0xf]
    %v303 = vld [vmem:[%s6] sm:$0x1]
    %v305 = vlaneseq
    %v306 = vshrl.u32 %v305, 7
    %v307 = vsub.s32 0, %v306
    %v308 = vrot.slane %v303, %v307
    %v326 = vunpack.c.l.b16 %v287
    %v327 = vunpack.c.l.b16 %v288
    %v328 = vunpack.c.l.b16 %v289
    %v329 = vunpack.c.l.b16 %v290
    %v330 = vunpack.c.l.b16 %v291
    %v331 = vunpack.c.l.b16 %v292
    %v332 = vunpack.c.l.b16 %v293
    %v333 = vunpack.c.l.b16 %v294
    %v334 = vunpack.c.l.b16 %v295
    %v335 = vunpack.c.l.b16 %v296
    %v336 = vunpack.c.l.b16 %v297
    %v337 = vunpack.c.l.b16 %v298
    %v338 = vunpack.c.l.b16 %v299
    %v339 = vunpack.c.l.b16 %v300
    %v340 = vunpack.c.l.b16 %v301
    %v341 = vunpack.c.l.b16 %v302
    %v342 = vpack.c.b16 %v327, %v326
    %v343 = vpack.c.b16 %v329, %v328
    %v344 = vpack.c.b16 %v331, %v330
    %v345 = vpack.c.b16 %v333, %v332
    %v346 = vpack.c.b16 %v335, %v334
    %v347 = vpack.c.b16 %v337, %v336
    %v348 = vpack.c.b16 %v339, %v338
    %v349 = vpack.c.b16 %v341, %v340
    %358 = vmatprep.subr.bf16.mxu0 0
    %359 = vmatpush1.bf16.msra.mxu0 %v342
    %360 = vmatprep.subr.bf16.mxu0 0
    %361 = vmatpush1.bf16.msra.mxu0 %v343
    %362 = vmatprep.subr.bf16.mxu0 0
    %363 = vmatpush1.bf16.msra.mxu0 %v344
    %364 = vmatprep.subr.bf16.mxu0 0
    %365 = vmatpush1.bf16.msra.mxu0 %v345
    %366 = vmatprep.subr.bf16.mxu0 0
    %367 = vmatpush1.bf16.msra.mxu0 %v346
    %368 = vmatprep.subr.bf16.mxu0 0
    %369 = vmatpush1.bf16.msra.mxu0 %v347
    %370 = vmatprep.subr.bf16.mxu0 0
    %371 = vmatpush1.bf16.msra.mxu0 %v348
    %372 = vmatprep.subr.bf16.mxu0 0
    %373 = vmatpush1.bf16.msra.mxu0 %v349
    %374 = vmatprep.subr.bf16.mxu0 0
    %375 = vmatpush1.bf16.msra.mxu0 0
    %376 = vmatprep.subr.bf16.mxu0 0
    %377 = vmatpush1.bf16.msra.mxu0 0
    %378 = vmatprep.subr.bf16.mxu0 0
    %379 = vmatpush1.bf16.msra.mxu0 0
    %380 = vmatprep.subr.bf16.mxu0 0
    %381 = vmatpush1.bf16.msra.mxu0 0
    %382 = vmatprep.subr.bf16.mxu0 0
    %383 = vmatpush1.bf16.msra.mxu0 0
    %384 = vmatprep.subr.bf16.mxu0 0
    %385 = vmatpush1.bf16.msra.mxu0 0
    %386 = vmatprep.subr.bf16.mxu0 0
    %387 = vmatpush1.bf16.msra.mxu0 0
    %388 = vmatprep.subr.bf16.mxu0 0
    %389 = vmatpush1.bf16.msra.mxu0 0
    %390 = vmatprep.mubr.bf16.mxu0 0
    %391 = vmatmul.mubr.bf16.gmra.mrb[0].mxu0 %v286
    %v392 = vpop.f32.mrb[0].mxu0
    %v393 = vadd.f32 %v308, %v392
    %v394 = vpop.f32.mrb[0].mxu0
    %v395 = vpop.f32.mrb[0].mxu0
    %v396 = vpop.f32.mrb[0].mxu0
    %397 = vdwg.mxu0
    %v398 = vmax.f32 %v393, 0.0
    %v399 = vld [vmem:[%s7] sm:$0x1]
    %v400 = vld [vmem:[%s8] sm:$0x1]
    %vm401 = vcmask 523264
    %v402 = vsel %vm401, %v398, 0.0
    %403 = vadd.xlane.f32.xlu0 %v402
    %v404 = vpop.xlane.xlu0 %403
    %v405 = vrcp.pop 64.0
    %v406 = vmul.f32 %v404, %v405
    %v407 = vsub.f32 %v398, %v406
    %v408 = vmul.f32 %v407, %v407
    %v409 = vsel %vm401, %v408, 0.0
    %410 = vadd.xlane.f32.xlu0 %v409
    %v411 = vpop.xlane.xlu0 %410
    %v412 = vmul.f32 %v411, %v405
    %v413 = vadd.f32 %v412, 1e-05
    %v414 = vrsqrt.pop %v413
    %v415 = vmul.f32 %v407, %v414
    %v417 = vlaneseq
    %v418 = vshrl.u32 %v417, 7
    %v419 = vsub.s32 0, %v418
    %v420 = vrot.slane %v399, %v419
    %v422 = vmul.f32 %v415, %v420
    %v424 = vlaneseq
    %v425 = vshrl.u32 %v424, 7
    %v426 = vsub.s32 0, %v425
    %v427 = vrot.slane %v400, %v426
    %v429 = vadd.f32 %v422, %v427
    %v430 = vpack.c.bf16 %v429, %v429
    %v431 = vld [vmem:[%s9] sm:$0xf]
    %v432 = vld [vmem:[%s9 + $0x4] sm:$0xf]
    %v433 = vld [vmem:[%s9 + $0x8] sm:$0xf]
    %v434 = vld [vmem:[%s9 + $0xc] sm:$0xf]
    %v435 = vld [vmem:[%s9 + $0x10] sm:$0xf]
    %v436 = vld [vmem:[%s9 + $0x14] sm:$0xf]
    %v437 = vld [vmem:[%s9 + $0x18] sm:$0xf]
    %v438 = vld [vmem:[%s9 + $0x1c] sm:$0xf]
    %v439 = vld [vmem:[%s10] sm:$0x1]
    %v441 = vlaneseq
    %v442 = vshrl.u32 %v441, 7
    %v443 = vsub.s32 0, %v442
    %v444 = vrot.slane %v439, %v443
    %v454 = vunpack.c.l.b16 %v431
    %v455 = vunpack.c.l.b16 %v432
    %v456 = vunpack.c.l.b16 %v433
    %v457 = vunpack.c.l.b16 %v434
    %v458 = vunpack.c.l.b16 %v435
    %v459 = vunpack.c.l.b16 %v436
    %v460 = vunpack.c.l.b16 %v437
    %v461 = vunpack.c.l.b16 %v438
    %v462 = vpack.c.b16 %v455, %v454
    %v463 = vpack.c.b16 %v457, %v456
    %v464 = vpack.c.b16 %v459, %v458
    %v465 = vpack.c.b16 %v461, %v460
    %v471 = vsel %vm401, %v430, 0
    %473 = vmatprep.subr.bf16.mxu0 0
    %474 = vmatpush1.bf16.msra.mxu0 %v462
    %475 = vmatprep.subr.bf16.mxu0 0
    %476 = vmatpush1.bf16.msra.mxu0 %v463
    %477 = vmatprep.subr.bf16.mxu0 0
    %478 = vmatpush1.bf16.msra.mxu0 %v464
    %479 = vmatprep.subr.bf16.mxu0 0
    %480 = vmatpush1.bf16.msra.mxu0 %v465
    %481 = vmatprep.subr.bf16.mxu0 0
    %482 = vmatpush1.bf16.msra.mxu0 0
    %483 = vmatprep.subr.bf16.mxu0 0
    %484 = vmatpush1.bf16.msra.mxu0 0
    %485 = vmatprep.subr.bf16.mxu0 0
    %486 = vmatpush1.bf16.msra.mxu0 0
    %487 = vmatprep.subr.bf16.mxu0 0
    %488 = vmatpush1.bf16.msra.mxu0 0
    %489 = vmatprep.subr.bf16.mxu0 0
    %490 = vmatpush1.bf16.msra.mxu0 0
    %491 = vmatprep.subr.bf16.mxu0 0
    %492 = vmatpush1.bf16.msra.mxu0 0
    %493 = vmatprep.subr.bf16.mxu0 0
    %494 = vmatpush1.bf16.msra.mxu0 0
    %495 = vmatprep.subr.bf16.mxu0 0
    %496 = vmatpush1.bf16.msra.mxu0 0
    %497 = vmatprep.subr.bf16.mxu0 0
    %498 = vmatpush1.bf16.msra.mxu0 0
    %499 = vmatprep.subr.bf16.mxu0 0
    %500 = vmatpush1.bf16.msra.mxu0 0
    %501 = vmatprep.subr.bf16.mxu0 0
    %502 = vmatpush1.bf16.msra.mxu0 0
    %503 = vmatprep.subr.bf16.mxu0 0
    %504 = vmatpush1.bf16.msra.mxu0 0
    %505 = vmatprep.mubr.bf16.mxu0 0
    %506 = vmatmul.mubr.bf16.gmra.mrb[0].mxu0 %v471
    %v507 = vpop.f32.mrb[0].mxu0
    %v508 = vadd.f32 %v444, %v507
    %v509 = vpop.f32.mrb[0].mxu0
    %v510 = vpop.f32.mrb[0].mxu0
    %v511 = vpop.f32.mrb[0].mxu0
    %512 = vdwg.mxu0
    %v513 = vlaneseq
    %v514 = vand.u32 %v513, 127
    %vm515 = vcmp.ge.s32.totalorder %v514, 6
    %vm516 = vcmp.lt.s32.totalorder %v514, 10
    %vm517 = vmand %vm515, %vm516
    %vm518 = vcmp.eq.s32.totalorder %v514, 1
    %vm519 = vcmp.eq.s32.totalorder %v514, 10
    %vm520 = vmor %vm518, %vm519
    %v521 = vsel %vm517, %v508, -inf
    %vm522 = vcmask 130048
    %v523 = vsel %vm522, %v521, -inf
    %524 = vmax.xlane.f32.xlu0 %v523
    %v525 = vpop.xlane.xlu0 %524
    %v526 = vsub.f32 %v521, %v525
    %v527 = vmul.f32 %v526, 1.442695
    %v528 = vpow.pop %v527
    %v529 = vsel %vm522, %v528, 0.0
    %530 = vadd.xlane.f32.xlu0 %v529
    %v531 = vpop.xlane.xlu0 %530
    %v532 = vrcp.pop %v531
    %v533 = vmul.f32 %v528, %v532
    %v534 = vxor.u32 %v508, 2147483648
    %v535 = vmul.f32 %v534, 1.442695
    %v536 = vpow.pop %v535
    %v537 = vadd.f32 %v536, 1.0
    %v538 = vrcp.pop %v537
    %v539 = vmul.f32 1.0, %v538
    %v540 = vsel %vm520, %v539, %v508
    %v541 = vsel %vm517, %v533, %v540
    %542 = vst.msk [vmem:[#allocation2] sm:$0xff] %vm522, %v541
    // Predicated region
    $region46: #{tpu_custom_call.1} parent=1 // pred_check
      _
    $region47: #{tpu_custom_call.1} parent=1 // pred_check_branch
      %544 = sbr.rel (0) target = $region49
    $region48: #{tpu_custom_call.1} parent=1 // pred_region
      %s546 = ssub.s32 128, 32
      %547 = vsyncadd [#allocation3], %s546
      %s548 = sshll.u32 [#allocation2], 4
      %s549 = int_to_ptr.vmem [resolvable:$true] %s548
      %554 = dma.vmem_to_hbm [thread:$0]  %s549, 32, %s11, [#allocation3], 32, 32, 2
    $region49: #{tpu_custom_call.1} parent=1 // pred_fallthru
      _
    // Predicated region
    $region50: #{tpu_custom_call.1} parent=1 // pred_check
      _
    $region51: #{tpu_custom_call.1} parent=1 // pred_check_branch
      %556 = sbr.rel (0) target = $region53
    $region52: #{tpu_custom_call.1} parent=1 // pred_region
      %557 = dma.done [#allocation3], 128
    $region53: #{tpu_custom_call.1} parent=1 // pred_fallthru
      _
    %558 = vsyncpa [#allocation3], 1

</llo_original>
